<compile_context>
chip_gen: v7x
topology: tpu7x:2x2x1
jax: 0.10.0
libtpu: 0.0.40
codegen_flags: <defaults>
</compile_context>

<pallas_src>
import math
from functools import partial

import jax
import jax.numpy as jnp
from jax.experimental import pallas as pl
from jax.experimental.pallas import tpu as pltpu

NUM_CONCEPTS = 10
FEAT_DIM = 512
CP_HIDDEN = 128   # concept_predictor hidden width
CLS_HIDDEN = 32   # classifier hidden width
LANE = 128        # TPU lane width; narrow dims are padded to this


def _round_up(a, b):
    return (a + b - 1) // b * b


def _cdiv(a, b):
    return -(-a // b)


def _cbm_kernel(x_ref,             # [TB*C, TS]   image tile ([B*C, HW] layout)
                e_ref,             # [TB*C, 128]  0/1 channel-lane scatter mask
                we_ref, be_ref,    # [128, 512], [1, 512]   encoder stand-in
                w1_ref, b1_ref,    # [512, 128], [1, 128]
                w2_ref, b2_ref,    # [128, 128], [1, 128]   (10 -> 128 lane pad)
                w3_ref, b3_ref,    # [128, 128], [1, 128]   (10x32 -> 128x128 pad)
                w4_ref, b4_ref,    # [128, 128], [1, 128]   (32x1 -> 128x128 pad)
                logits_ref,        # out [TB, 128]  (column 0 is the logit)
                concepts_ref,      # out [TB, 128]  (columns 0..9 are the concepts)
                acc_ref,           # scratch [TB*C, 128] f32 pooled-sum accumulator
                ones_ref,          # scratch [TS, 128]   all-ones RHS for the MXU sum
                *, channels, inv_hw):
    k = pl.program_id(1)
    nk = pl.num_programs(1)

    @pl.when(k == 0)
    def _init():
        acc_ref[...] = jnp.zeros(acc_ref.shape, acc_ref.dtype)
        ones_ref[...] = jnp.ones(ones_ref.shape, ones_ref.dtype)

    # ---- hot loop: spatial partial sums on the (otherwise idle) MXU ----
    # acc[r, l] accumulates sum_s x[r, s] identically in every lane l: no
    # per-step dtype cast and no cross-lane VPU/XLU reduction.
    acc_ref[...] += jnp.dot(x_ref[...], ones_ref[...],
                            preferred_element_type=jnp.float32)

    @pl.when(k == nk - 1)
    def _epilogue():
        tbc = acc_ref.shape[0]          # TB * C
        tb = logits_ref.shape[0]        # TB
        c = channels

        # ---- scatter row sums to channel lanes, sum each batch group ----
        # masked[b*C + ch, ch] = rowsum(b, ch), zero elsewhere.
        masked = acc_ref[...] * e_ref[...]                               # [TBC, 128]
        # msel[b, r] = 1 iff row r belongs to batch b (div/mod-free iota build).
        b_row = jax.lax.broadcasted_iota(jnp.int32, (tb, tbc), 0)
        r_col = jax.lax.broadcasted_iota(jnp.int32, (tb, tbc), 1)
        msel = jnp.logical_and(r_col >= b_row * c, r_col < (b_row + 1) * c)
        pooled = jnp.dot(msel.astype(jnp.float32), masked,
                         preferred_element_type=jnp.float32) * inv_hw    # [TB, 128]

        # ---- encoder stand-in: GAP + Linear(C -> 512) (lane-padded We) ----
        feats = jnp.dot(pooled, we_ref[...],
                        preferred_element_type=jnp.float32) + be_ref[...]  # [TB, 512]

        # ---- concept_predictor: Linear(512,128) -> ReLU -> Linear(128,10) -> Sigmoid
        h1 = jnp.dot(feats, w1_ref[...],
                     preferred_element_type=jnp.float32) + b1_ref[...]
        h1 = jnp.maximum(h1, 0.0)
        c_logits = jnp.dot(h1, w2_ref[...],
                           preferred_element_type=jnp.float32) + b2_ref[...]
        concepts = jax.nn.sigmoid(c_logits)                              # EUP logistic
        # zero the padded concept lanes (>= NUM_CONCEPTS) so the slab is clean
        lane_id = jax.lax.broadcasted_iota(jnp.int32, concepts.shape, 1)
        concepts = jnp.where(lane_id < NUM_CONCEPTS, concepts, 0.0)

        # ---- classifier: Linear(10,32) -> ReLU -> Linear(32,1), lane-padded ----
        h2 = jnp.dot(concepts, w3_ref[...],
                     preferred_element_type=jnp.float32) + b3_ref[...]
        h2 = jnp.maximum(h2, 0.0)
        logits = jnp.dot(h2, w4_ref[...],
                         preferred_element_type=jnp.float32) + b4_ref[...]

        concepts_ref[...] = concepts.astype(concepts_ref.dtype)
        logits_ref[...] = logits.astype(logits_ref.dtype)


def prepare_params(params):
    """One-time (outside the per-call path) lane-padding of the MLP weights."""
    def pad2(a, rows, cols):
        a = a.astype(jnp.float32)
        if a.shape[0] > rows or a.shape[1] > cols:
            raise NotImplementedError(
                "channel/width exceeds lane padding; retile for C > 128")
        return jnp.pad(a, ((0, rows - a.shape[0]), (0, cols - a.shape[1])))

    return dict(
        we_pad=pad2(params["we"], LANE, FEAT_DIM),        # [128, 512]
        be=params["be"].astype(jnp.float32),              # [1, 512]
        w1=params["w1"].astype(jnp.float32),              # [512, 128]
        b1=params["b1"].astype(jnp.float32),              # [1, 128]
        w2p=pad2(params["w2"], CP_HIDDEN, LANE),          # [128, 128]
        b2p=pad2(params["b2"], 1, LANE),
        w3p=pad2(params["w3"], LANE, LANE),
        b3p=pad2(params["b3"], 1, LANE),
        w4p=pad2(params["w4"], LANE, LANE),
        b4p=pad2(params["b4"], 1, LANE),
    )


def concept_bottleneck_forward(x, prepped, *, max_batch_tile=256,
                               max_spatial_tile=2048):
    """x: [B, C, H, W] (NCHW, f32 or bf16). Returns (logits [B,1], concepts [B,10])."""
    B, C, H, W = x.shape
    HW = H * W
    if C > LANE:
        raise NotImplementedError("C > 128 channels not supported by this tiling")
    itemsz = jnp.dtype(x.dtype).itemsize

    # ---- batch tiling ------------------------------------------------------
    # rows of the [B*C, HW] view pack `rows_per_tile` per (8,128) tile
    rows_per_tile = max(8, 32 // itemsz)                 # f32: 8, bf16: 16
    g_img = rows_per_tile // math.gcd(C, rows_per_tile)  # TB granule for the image rows
    granule = (g_img * 8) // math.gcd(g_img, 8)          # also keep TB % 8 == 0 (f32 outs)
    if B >= 4 * granule or B > max_batch_tile:
        # >= 2 batch tiles so both v7x TensorCores get work; cap tile at max_batch_tile
        n_tiles = max(2, _cdiv(B, max_batch_tile))
        TB = _round_up(_cdiv(B, n_tiles), granule)
        B_pad = _round_up(B, TB)
    else:
        TB, B_pad = B, B                                 # single tile == full array
    nb = B_pad // TB
    TBC = TB * C

    # ---- spatial tiling (lane axis) ----------------------------------------
    img_budget = 12 * 1024 * 1024                        # double-buffered image tile cap
    if HW <= max_spatial_tile and 2 * TBC * HW * itemsz <= img_budget:
        TS, HW_pad, nk = HW, HW, 1                       # single tile, no padding
    else:
        TS = min(max_spatial_tile, _round_up(HW, LANE))
        TS = max(LANE, (TS // LANE) * LANE)
        while TS > LANE and 2 * TBC * TS * itemsz > img_budget:
            TS = max(LANE, ((TS // 2) // LANE) * LANE)
        HW_pad = _round_up(HW, TS)
        nk = HW_pad // TS

    # ---- image view: pad/copy only when actually required ------------------
    if B_pad != B or HW_pad != HW:
        x3 = x.reshape(B, C, HW)
        x3 = jnp.pad(x3, ((0, B_pad - B), (0, 0), (0, HW_pad - HW)))
        x2d = x3.reshape(B_pad * C, HW_pad)
    else:
        x2d = x.reshape(B * C, HW)

    # ---- tiny resident channel-lane scatter mask E[r, l] = (l == r % C) ----
    chan = jnp.arange(TBC, dtype=jnp.int32) % C
    e_mat = (jnp.arange(LANE, dtype=jnp.int32)[None, :] == chan[:, None]
             ).astype(jnp.float32)                                       # [TBC, 128]

    resident = (e_mat, prepped["we_pad"], prepped["be"], prepped["w1"],
                prepped["b1"], prepped["w2p"], prepped["b2p"],
                prepped["w3p"], prepped["b3p"], prepped["w4p"], prepped["b4p"])

    def resident_spec(a):
        return pl.BlockSpec(a.shape, lambda i, k: (0, 0))   # stays in VMEM across grid

    in_specs = ([pl.BlockSpec((TBC, TS), lambda i, k: (i, k))]
                + [resident_spec(a) for a in resident])
    out_specs = (pl.BlockSpec((TB, LANE), lambda i, k: (i, 0)),
                 pl.BlockSpec((TB, LANE), lambda i, k: (i, 0)))
    out_shape = (jax.ShapeDtypeStruct((B_pad, LANE), jnp.float32),   # logits slab
                 jax.ShapeDtypeStruct((B_pad, LANE), jnp.float32))   # concepts slab

    flops = int(2 * B_pad * C * HW_pad * LANE                 # streaming ones-matmul
                + 2 * nb * TB * TBC * LANE                    # selector matmul
                + 2 * B_pad * LANE * FEAT_DIM                 # pooled @ We
                + 2 * B_pad * FEAT_DIM * CP_HIDDEN
                + 3 * 2 * B_pad * LANE * LANE)
    bytes_accessed = int(x2d.size * x2d.dtype.itemsize
                         + sum(a.size * a.dtype.itemsize for a in resident)
                         + 2 * B_pad * LANE * 4)
    cost = pl.CostEstimate(flops=flops,
                           transcendentals=int(B_pad * LANE),
                           bytes_accessed=bytes_accessed)

    kernel = partial(_cbm_kernel, channels=C, inv_hw=1.0 / float(HW))

    logits_pad, concepts_pad = pl.pallas_call(
        kernel,
        out_shape=out_shape,
        grid_spec=pltpu.PrefetchScalarGridSpec(
            num_scalar_prefetch=0,
            grid=(nb, nk),
            in_specs=in_specs,
            out_specs=out_specs,
            scratch_shapes=[pltpu.VMEM((TBC, LANE), jnp.float32),   # pooled-sum acc
                            pltpu.VMEM((TS, LANE), x2d.dtype)],     # all-ones RHS
        ),
        compiler_params=pltpu.CompilerParams(
            dimension_semantics=("parallel", "arbitrary"),
            vmem_limit_bytes=32 * 1024 * 1024,   # fits v7x 64 MiB VMEM and v5e/v6e
        ),
        cost_estimate=cost,
    )(x2d, *resident)

    logits = logits_pad[:B, :1]
    concepts = concepts_pad[:B, :NUM_CONCEPTS]
    return logits, concepts


def init_params(key, in_channels):
    """Deterministic init mimicking PyTorch Linear default (U(-1/sqrt(fan_in), +))."""
    def linear(key, fan_in, fan_out):
        kw, kb = jax.random.split(key)
        bound = 1.0 / jnp.sqrt(jnp.float32(fan_in))
        w = jax.random.uniform(kw, (fan_in, fan_out), jnp.float32, -bound, bound)
        b = jax.random.uniform(kb, (1, fan_out), jnp.float32, -bound, bound)
        return w, b

    keys = jax.random.split(key, 5)
    we, be = linear(keys[0], in_channels, FEAT_DIM)       # encoder stand-in
    w1, b1 = linear(keys[1], FEAT_DIM, CP_HIDDEN)         # concept_predictor[0]
    w2, b2 = linear(keys[2], CP_HIDDEN, NUM_CONCEPTS)     # concept_predictor[2]
    w3, b3 = linear(keys[3], NUM_CONCEPTS, CLS_HIDDEN)    # classifier[0]
    w4, b4 = linear(keys[4], CLS_HIDDEN, 1)               # classifier[2]
    return dict(we=we, be=be, w1=w1, b1=b1, w2=w2, b2=b2,
                w3=w3, b3=b3, w4=w4, b4=b4)


def reference_forward(x, params):
    """Pure-JAX f32 reference."""
    B, C, H, W = x.shape
    pooled = jnp.mean(x.astype(jnp.float32).reshape(B, C, H * W), axis=-1)
    feats = pooled @ params["we"] + params["be"]
    h1 = jnp.maximum(feats @ params["w1"] + params["b1"], 0.0)
    concepts = jax.nn.sigmoid(h1 @ params["w2"] + params["b2"])
    h2 = jnp.maximum(concepts @ params["w3"] + params["b3"], 0.0)
    logits = h2 @ params["w4"] + params["b4"]
    return logits, concepts


if __name__ == "__main__":
    key = jax.random.PRNGKey(0)
    kx, kp = jax.random.split(key)

    B, C, H, W = 2, 4, 16, 16
    x = jax.random.normal(kx, (B, C, H, W), jnp.float32)
    params = init_params(kp, C)
    prepped = prepare_params(params)   # one-time weight prep, outside the call path

    # max_spatial_tile=128 forces 2 spatial grid steps so the streaming
    # reduction (init / MXU accumulate / epilogue) is exercised at this shape.
    logits, concepts = concept_bottleneck_forward(x, prepped, max_spatial_tile=128)
    jax.block_until_ready((logits, concepts))

    ref_logits, ref_concepts = reference_forward(x, params)
    assert logits.shape == (B, 1) and concepts.shape == (B, NUM_CONCEPTS)
    assert bool(jnp.all(jnp.isfinite(logits))) and bool(jnp.all(jnp.isfinite(concepts)))
    # TPU matmuls use bf16 multiplies (f32 accumulate) by default in both the
    # kernel and the reference, so allow ~1e-2 absolute slack.
    assert jnp.allclose(concepts, ref_concepts, atol=2e-2, rtol=2e-2), (
        concepts, ref_concepts)
    assert jnp.allclose(logits, ref_logits, atol=2e-2, rtol=2e-2), (
        logits, ref_logits)

    print("KERNEL_OK")
</pallas_src>

<mosaic_0001>
module attributes {stable_mosaic.version = 11 : i64} {
  func.func @_cbm_kernel(%arg0: i32, %arg1: i32, %arg2: memref<8x128xf32, #tpu.memory_space<vmem>>, %arg3: memref<8x128xf32, #tpu.memory_space<vmem>>, %arg4: memref<128x512xf32, #tpu.memory_space<vmem>>, %arg5: memref<1x512xf32, #tpu.memory_space<vmem>>, %arg6: memref<512x128xf32, #tpu.memory_space<vmem>>, %arg7: memref<1x128xf32, #tpu.memory_space<vmem>>, %arg8: memref<128x128xf32, #tpu.memory_space<vmem>>, %arg9: memref<1x128xf32, #tpu.memory_space<vmem>>, %arg10: memref<128x128xf32, #tpu.memory_space<vmem>>, %arg11: memref<1x128xf32, #tpu.memory_space<vmem>>, %arg12: memref<128x128xf32, #tpu.memory_space<vmem>>, %arg13: memref<1x128xf32, #tpu.memory_space<vmem>>, %arg14: memref<2x128xf32, #tpu.memory_space<vmem>>, %arg15: memref<2x128xf32, #tpu.memory_space<vmem>>, %arg16: memref<8x128xf32, #tpu.memory_space<vmem>>, %arg17: memref<128x128xf32, #tpu.memory_space<vmem>>) attributes {dimension_semantics = [#tpu.dimension_semantics<parallel>, #tpu.dimension_semantics<arbitrary>], iteration_bounds = array<i64: 1, 2>, scalar_prefetch = 0 : i64, scratch_operands = 2 : i64, tpu.core_type = #tpu.core_type<tc>, window_params = [{transform_indices = @transform_0, window_bounds = array<i64: 8, 128>}, {pipeline_mode = #tpu.pipeline_mode<synchronous>, transform_indices = @transform_1, window_bounds = array<i64: 8, 128>}, {pipeline_mode = #tpu.pipeline_mode<synchronous>, transform_indices = @transform_2, window_bounds = array<i64: 128, 512>}, {pipeline_mode = #tpu.pipeline_mode<synchronous>, transform_indices = @transform_3, window_bounds = array<i64: 1, 512>}, {pipeline_mode = #tpu.pipeline_mode<synchronous>, transform_indices = @transform_4, window_bounds = array<i64: 512, 128>}, {pipeline_mode = #tpu.pipeline_mode<synchronous>, transform_indices = @transform_5, window_bounds = array<i64: 1, 128>}, {pipeline_mode = #tpu.pipeline_mode<synchronous>, transform_indices = @transform_6, window_bounds = array<i64: 128, 128>}, {pipeline_mode = #tpu.pipeline_mode<synchronous>, transform_indices = @transform_7, window_bounds = array<i64: 1, 128>}, {pipeline_mode = #tpu.pipeline_mode<synchronous>, transform_indices = @transform_8, window_bounds = array<i64: 128, 128>}, {pipeline_mode = #tpu.pipeline_mode<synchronous>, transform_indices = @transform_9, window_bounds = array<i64: 1, 128>}, {pipeline_mode = #tpu.pipeline_mode<synchronous>, transform_indices = @transform_10, window_bounds = array<i64: 128, 128>}, {pipeline_mode = #tpu.pipeline_mode<synchronous>, transform_indices = @transform_11, window_bounds = array<i64: 1, 128>}, {transform_indices = @transform_12, window_bounds = array<i64: 2, 128>}, {transform_indices = @transform_13, window_bounds = array<i64: 2, 128>}]} {
    %c0_i32 = arith.constant 0 : i32
    %0 = arith.cmpi eq, %arg1, %c0_i32 : i32
    %1 = arith.extui %0 : i1 to i32
    %c0_i32_0 = arith.constant 0 : i32
    %2 = arith.cmpi ne, %1, %c0_i32_0 : i32
    scf.if %2 {
      %cst_9 = arith.constant 0.000000e+00 : f32
      %12 = vector.broadcast %cst_9 : f32 to vector<8x128xf32>
      %c0_10 = arith.constant 0 : index
      %c0_11 = arith.constant 0 : index
      %13 = vector.load %arg16[%c0_10, %c0_11] : memref<8x128xf32, #tpu.memory_space<vmem>>, vector<8x128xf32>
      tpu.vector_store %arg16[%c0_10, %c0_11], %12 {strides = array<i32>} : memref<8x128xf32, #tpu.memory_space<vmem>>, vector<8x128xf32>,
      %cst_12 = arith.constant 1.000000e+00 : f32
      %14 = vector.broadcast %cst_12 : f32 to vector<128x128xf32>
      %c0_13 = arith.constant 0 : index
      %c0_14 = arith.constant 0 : index
      %15 = vector.load %arg17[%c0_13, %c0_14] : memref<128x128xf32, #tpu.memory_space<vmem>>, vector<128x128xf32>
      tpu.vector_store %arg17[%c0_13, %c0_14], %14 {strides = array<i32>} : memref<128x128xf32, #tpu.memory_space<vmem>>, vector<128x128xf32>,
    } else {
    }
    %c0 = arith.constant 0 : index
    %c0_1 = arith.constant 0 : index
    %3 = vector.load %arg16[%c0, %c0_1] : memref<8x128xf32, #tpu.memory_space<vmem>>, vector<8x128xf32>
    %c0_2 = arith.constant 0 : index
    %c0_3 = arith.constant 0 : index
    %4 = vector.load %arg2[%c0_2, %c0_3] : memref<8x128xf32, #tpu.memory_space<vmem>>, vector<8x128xf32>
    %c0_4 = arith.constant 0 : index
    %c0_5 = arith.constant 0 : index
    %5 = vector.load %arg17[%c0_4, %c0_5] : memref<128x128xf32, #tpu.memory_space<vmem>>, vector<128x128xf32>
    %cst = arith.constant dense<0.000000e+00> : vector<8x128xf32>
    %6 = tpu.matmul %4, %5, %cst {dimension_numbers = #tpu.dot_dimension_numbers<[1], [0], [0], [1], [0, 0, 1, 1], [], []>} : vector<8x128xf32>, vector<128x128xf32>, vector<8x128xf32> -> vector<8x128xf32>
    %7 = arith.addf %3, %6 : vector<8x128xf32>
    %c0_6 = arith.constant 0 : index
    %c0_7 = arith.constant 0 : index
    %8 = vector.load %arg16[%c0_6, %c0_7] : memref<8x128xf32, #tpu.memory_space<vmem>>, vector<8x128xf32>
    tpu.vector_store %arg16[%c0_6, %c0_7], %7 {strides = array<i32>} : memref<8x128xf32, #tpu.memory_space<vmem>>, vector<8x128xf32>,
    %c1_i32 = arith.constant 1 : i32
    %9 = arith.cmpi eq, %arg1, %c1_i32 : i32
    %10 = arith.extui %9 : i1 to i32
    %c0_i32_8 = arith.constant 0 : i32
    %11 = arith.cmpi ne, %10, %c0_i32_8 : i32
    scf.if %11 {
      %c0_9 = arith.constant 0 : index
      %c0_10 = arith.constant 0 : index
      %12 = vector.load %arg16[%c0_9, %c0_10] : memref<8x128xf32, #tpu.memory_space<vmem>>, vector<8x128xf32>
      %c0_11 = arith.constant 0 : index
      %c0_12 = arith.constant 0 : index
      %13 = vector.load %arg3[%c0_11, %c0_12] : memref<8x128xf32, #tpu.memory_space<vmem>>, vector<8x128xf32>
      %14 = arith.mulf %12, %13 : vector<8x128xf32>
      %15 = tpu.iota {dimensions = array<i32: 0>} : vector<2x8xi32>
      %16 = tpu.iota {dimensions = array<i32: 1>} : vector<2x8xi32>
      %c4_i32 = arith.constant 4 : i32
      %17 = vector.broadcast %c4_i32 : i32 to vector<2x8xi32>
      %18 = arith.muli %15, %17 : vector<2x8xi32>
      %19 = arith.cmpi sge, %16, %18 : vector<2x8xi32>
      %c1_i32_13 = arith.constant 1 : i32
      %20 = vector.broadcast %c1_i32_13 : i32 to vector<2x8xi32>
      %21 = arith.addi %15, %20 : vector<2x8xi32>
      %c4_i32_14 = arith.constant 4 : i32
      %22 = vector.broadcast %c4_i32_14 : i32 to vector<2x8xi32>
      %23 = arith.muli %21, %22 : vector<2x8xi32>
      %24 = arith.cmpi slt, %16, %23 : vector<2x8xi32>
      %25 = arith.andi %19, %24 : vector<2x8xi1>
      %26 = arith.extui %25 : vector<2x8xi1> to vector<2x8xi32>
      %27 = arith.sitofp %26 : vector<2x8xi32> to vector<2x8xf32>
      %cst_15 = arith.constant dense<0.000000e+00> : vector<2x128xf32>
      %28 = tpu.matmul %27, %14, %cst_15 {dimension_numbers = #tpu.dot_dimension_numbers<[1], [0], [0], [1], [0, 0, 1, 1], [], []>} : vector<2x8xf32>, vector<8x128xf32>, vector<2x128xf32> -> vector<2x128xf32>
      %cst_16 = arith.constant 3.906250e-03 : f32
      %29 = vector.broadcast %cst_16 : f32 to vector<2x128xf32>
      %30 = arith.mulf %28, %29 : vector<2x128xf32>
      %c0_17 = arith.constant 0 : index
      %c0_18 = arith.constant 0 : index
      %31 = vector.load %arg4[%c0_17, %c0_18] : memref<128x512xf32, #tpu.memory_space<vmem>>, vector<128x512xf32>
      %cst_19 = arith.constant dense<0.000000e+00> : vector<2x512xf32>
      %32 = tpu.matmul %30, %31, %cst_19 {dimension_numbers = #tpu.dot_dimension_numbers<[1], [0], [0], [1], [0, 0, 1, 1], [], []>} : vector<2x128xf32>, vector<128x512xf32>, vector<2x512xf32> -> vector<2x512xf32>
      %c0_20 = arith.constant 0 : index
      %c0_21 = arith.constant 0 : index
      %33 = vector.load %arg5[%c0_20, %c0_21] : memref<1x512xf32, #tpu.memory_space<vmem>>, vector<1x512xf32>
      %34 = vector.broadcast %33 : vector<1x512xf32> to vector<2x512xf32>
      %35 = arith.addf %32, %34 : vector<2x512xf32>
      %c0_22 = arith.constant 0 : index
      %c0_23 = arith.constant 0 : index
      %36 = vector.load %arg6[%c0_22, %c0_23] : memref<512x128xf32, #tpu.memory_space<vmem>>, vector<512x128xf32>
      %cst_24 = arith.constant dense<0.000000e+00> : vector<2x128xf32>
      %37 = tpu.matmul %35, %36, %cst_24 {dimension_numbers = #tpu.dot_dimension_numbers<[1], [0], [0], [1], [0, 0, 1, 1], [], []>} : vector<2x512xf32>, vector<512x128xf32>, vector<2x128xf32> -> vector<2x128xf32>
      %c0_25 = arith.constant 0 : index
      %c0_26 = arith.constant 0 : index
      %38 = vector.load %arg7[%c0_25, %c0_26] : memref<1x128xf32, #tpu.memory_space<vmem>>, vector<1x128xf32>
      %39 = vector.broadcast %38 : vector<1x128xf32> to vector<2x128xf32>
      %40 = arith.addf %37, %39 : vector<2x128xf32>
      %cst_27 = arith.constant 0.000000e+00 : f32
      %41 = vector.broadcast %cst_27 : f32 to vector<2x128xf32>
      %42 = arith.maximumf %40, %41 : vector<2x128xf32>
      %c0_28 = arith.constant 0 : index
      %c0_29 = arith.constant 0 : index
      %43 = vector.load %arg8[%c0_28, %c0_29] : memref<128x128xf32, #tpu.memory_space<vmem>>, vector<128x128xf32>
      %cst_30 = arith.constant dense<0.000000e+00> : vector<2x128xf32>
      %44 = tpu.matmul %42, %43, %cst_30 {dimension_numbers = #tpu.dot_dimension_numbers<[1], [0], [0], [1], [0, 0, 1, 1], [], []>} : vector<2x128xf32>, vector<128x128xf32>, vector<2x128xf32> -> vector<2x128xf32>
      %c0_31 = arith.constant 0 : index
      %c0_32 = arith.constant 0 : index
      %45 = vector.load %arg9[%c0_31, %c0_32] : memref<1x128xf32, #tpu.memory_space<vmem>>, vector<1x128xf32>
      %46 = vector.broadcast %45 : vector<1x128xf32> to vector<2x128xf32>
      %47 = arith.addf %44, %46 : vector<2x128xf32>
      %48 = arith.negf %47 : vector<2x128xf32>
      %49 = math.exp %48 : vector<2x128xf32>
      %cst_33 = arith.constant 1.000000e+00 : f32
      %50 = vector.broadcast %cst_33 : f32 to vector<2x128xf32>
      %51 = arith.addf %50, %49 : vector<2x128xf32>
      %52 = arith.divf %50, %51 : vector<2x128xf32>
      %53 = tpu.iota {dimensions = array<i32: 1>} : vector<2x128xi32>
      %c10_i32 = arith.constant 10 : i32
      %54 = vector.broadcast %c10_i32 : i32 to vector<2x128xi32>
      %55 = arith.cmpi slt, %53, %54 : vector<2x128xi32>
      %cst_34 = arith.constant 0.000000e+00 : f32
      %56 = vector.broadcast %cst_34 : f32 to vector<2x128xf32>
      %57 = arith.select %55, %52, %56 : vector<2x128xi1>, vector<2x128xf32>
      %c0_35 = arith.constant 0 : index
      %c0_36 = arith.constant 0 : index
      %58 = vector.load %arg10[%c0_35, %c0_36] : memref<128x128xf32, #tpu.memory_space<vmem>>, vector<128x128xf32>
      %cst_37 = arith.constant dense<0.000000e+00> : vector<2x128xf32>
      %59 = tpu.matmul %57, %58, %cst_37 {dimension_numbers = #tpu.dot_dimension_numbers<[1], [0], [0], [1], [0, 0, 1, 1], [], []>} : vector<2x128xf32>, vector<128x128xf32>, vector<2x128xf32> -> vector<2x128xf32>
      %c0_38 = arith.constant 0 : index
      %c0_39 = arith.constant 0 : index
      %60 = vector.load %arg11[%c0_38, %c0_39] : memref<1x128xf32, #tpu.memory_space<vmem>>, vector<1x128xf32>
      %61 = vector.broadcast %60 : vector<1x128xf32> to vector<2x128xf32>
      %62 = arith.addf %59, %61 : vector<2x128xf32>
      %cst_40 = arith.constant 0.000000e+00 : f32
      %63 = vector.broadcast %cst_40 : f32 to vector<2x128xf32>
      %64 = arith.maximumf %62, %63 : vector<2x128xf32>
      %c0_41 = arith.constant 0 : index
      %c0_42 = arith.constant 0 : index
      %65 = vector.load %arg12[%c0_41, %c0_42] : memref<128x128xf32, #tpu.memory_space<vmem>>, vector<128x128xf32>
      %cst_43 = arith.constant dense<0.000000e+00> : vector<2x128xf32>
      %66 = tpu.matmul %64, %65, %cst_43 {dimension_numbers = #tpu.dot_dimension_numbers<[1], [0], [0], [1], [0, 0, 1, 1], [], []>} : vector<2x128xf32>, vector<128x128xf32>, vector<2x128xf32> -> vector<2x128xf32>
      %c0_44 = arith.constant 0 : index
      %c0_45 = arith.constant 0 : index
      %67 = vector.load %arg13[%c0_44, %c0_45] : memref<1x128xf32, #tpu.memory_space<vmem>>, vector<1x128xf32>
      %68 = vector.broadcast %67 : vector<1x128xf32> to vector<2x128xf32>
      %69 = arith.addf %66, %68 : vector<2x128xf32>
      %c0_46 = arith.constant 0 : index
      %c0_47 = arith.constant 0 : index
      %70 = vector.load %arg15[%c0_46, %c0_47] : memref<2x128xf32, #tpu.memory_space<vmem>>, vector<2x128xf32>
      tpu.vector_store %arg15[%c0_46, %c0_47], %57 {strides = array<i32>} : memref<2x128xf32, #tpu.memory_space<vmem>>, vector<2x128xf32>,
      %c0_48 = arith.constant 0 : index
      %c0_49 = arith.constant 0 : index
      %71 = vector.load %arg14[%c0_48, %c0_49] : memref<2x128xf32, #tpu.memory_space<vmem>>, vector<2x128xf32>
      tpu.vector_store %arg14[%c0_48, %c0_49], %69 {strides = array<i32>} : memref<2x128xf32, #tpu.memory_space<vmem>>, vector<2x128xf32>,
    } else {
    }
    return
  }
  func.func @transform_0(%arg0: i32, %arg1: i32) -> (i32, i32) {
    %c0_i32 = arith.constant 0 : i32
    return %arg0, %arg1 : i32, i32
  }
  func.func @transform_1(%arg0: i32, %arg1: i32) -> (i32, i32) {
    %c0_i32 = arith.constant 0 : i32
    %c0_i32_0 = arith.constant 0 : i32
    %c0_i32_1 = arith.constant 0 : i32
    return %c0_i32, %c0_i32_0 : i32, i32
  }
  func.func @transform_2(%arg0: i32, %arg1: i32) -> (i32, i32) {
    %c0_i32 = arith.constant 0 : i32
    %c0_i32_0 = arith.constant 0 : i32
    %c0_i32_1 = arith.constant 0 : i32
    return %c0_i32, %c0_i32_0 : i32, i32
  }
  func.func @transform_3(%arg0: i32, %arg1: i32) -> (i32, i32) {
    %c0_i32 = arith.constant 0 : i32
    %c0_i32_0 = arith.constant 0 : i32
    %c0_i32_1 = arith.constant 0 : i32
    return %c0_i32, %c0_i32_0 : i32, i32
  }
  func.func @transform_4(%arg0: i32, %arg1: i32) -> (i32, i32) {
    %c0_i32 = arith.constant 0 : i32
    %c0_i32_0 = arith.constant 0 : i32
    %c0_i32_1 = arith.constant 0 : i32
    return %c0_i32, %c0_i32_0 : i32, i32
  }
  func.func @transform_5(%arg0: i32, %arg1: i32) -> (i32, i32) {
    %c0_i32 = arith.constant 0 : i32
    %c0_i32_0 = arith.constant 0 : i32
    %c0_i32_1 = arith.constant 0 : i32
    return %c0_i32, %c0_i32_0 : i32, i32
  }
  func.func @transform_6(%arg0: i32, %arg1: i32) -> (i32, i32) {
    %c0_i32 = arith.constant 0 : i32
    %c0_i32_0 = arith.constant 0 : i32
    %c0_i32_1 = arith.constant 0 : i32
    return %c0_i32, %c0_i32_0 : i32, i32
  }
  func.func @transform_7(%arg0: i32, %arg1: i32) -> (i32, i32) {
    %c0_i32 = arith.constant 0 : i32
    %c0_i32_0 = arith.constant 0 : i32
    %c0_i32_1 = arith.constant 0 : i32
    return %c0_i32, %c0_i32_0 : i32, i32
  }
  func.func @transform_8(%arg0: i32, %arg1: i32) -> (i32, i32) {
    %c0_i32 = arith.constant 0 : i32
    %c0_i32_0 = arith.constant 0 : i32
    %c0_i32_1 = arith.constant 0 : i32
    return %c0_i32, %c0_i32_0 : i32, i32
  }
  func.func @transform_9(%arg0: i32, %arg1: i32) -> (i32, i32) {
    %c0_i32 = arith.constant 0 : i32
    %c0_i32_0 = arith.constant 0 : i32
    %c0_i32_1 = arith.constant 0 : i32
    return %c0_i32, %c0_i32_0 : i32, i32
  }
  func.func @transform_10(%arg0: i32, %arg1: i32) -> (i32, i32) {
    %c0_i32 = arith.constant 0 : i32
    %c0_i32_0 = arith.constant 0 : i32
    %c0_i32_1 = arith.constant 0 : i32
    return %c0_i32, %c0_i32_0 : i32, i32
  }
  func.func @transform_11(%arg0: i32, %arg1: i32) -> (i32, i32) {
    %c0_i32 = arith.constant 0 : i32
    %c0_i32_0 = arith.constant 0 : i32
    %c0_i32_1 = arith.constant 0 : i32
    return %c0_i32, %c0_i32_0 : i32, i32
  }
  func.func @transform_12(%arg0: i32, %arg1: i32) -> (i32, i32) {
    %c0_i32 = arith.constant 0 : i32
    %c0_i32_0 = arith.constant 0 : i32
    return %arg0, %c0_i32 : i32, i32
  }
  func.func @transform_13(%arg0: i32, %arg1: i32) -> (i32, i32) {
    %c0_i32 = arith.constant 0 : i32
    %c0_i32_0 = arith.constant 0 : i32
    return %arg0, %c0_i32 : i32, i32
  }
}

</mosaic_0001>

<llo_original>
// kernel: tpu_custom_call.1
$region0: #{tpu_custom_call.1}
  #allocation0 [shape = 'u32[]', space=smem, size = 0x4, offset = 0x4, fixed_abs, tag = 'smem constant byte address 0x4 - core index']
  #allocation1 [shape = 'u32[144,128]{1,0:T(1,128)}', space=vmem, size = 0x12000, scoped, tag = 'internal scratch']
  #allocation2 [shape = 'f32[8,128]{1,0:T(8,128)}', space=vmem, size = 0x1000, scoped, tag = 'scratch operand']
  #allocation3 [shape = 'f32[128,128]{1,0:T(8,128)}', space=vmem, size = 0x10000, scoped, tag = 'scratch operand']
  %s0 = inlined_call_operand.hbm [shape: f32[8,256], index: 0, kind: input, shape index: {}]
  %s1 = inlined_call_operand.hbm [shape: f32[8,128], index: 1, kind: input, shape index: {}]
  %s2 = inlined_call_operand.hbm [shape: f32[128,512], index: 2, kind: input, shape index: {}]
  %s3 = inlined_call_operand.vmem [shape: f32[1,512], index: 3, kind: input, shape index: {}]
  %s4 = inlined_call_operand.hbm [shape: f32[512,128], index: 4, kind: input, shape index: {}]
  %s5 = inlined_call_operand.vmem [shape: f32[1,128], index: 5, kind: input, shape index: {}]
  %s6 = inlined_call_operand.hbm [shape: f32[128,128], index: 6, kind: input, shape index: {}]
  %s7 = inlined_call_operand.vmem [shape: f32[1,128], index: 7, kind: input, shape index: {}]
  %s8 = inlined_call_operand.hbm [shape: f32[128,128], index: 8, kind: input, shape index: {}]
  %s9 = inlined_call_operand.vmem [shape: f32[1,128], index: 9, kind: input, shape index: {}]
  %s10 = inlined_call_operand.hbm [shape: f32[128,128], index: 10, kind: input, shape index: {}]
  %s11 = inlined_call_operand.vmem [shape: f32[1,128], index: 11, kind: input, shape index: {}]
  %s12 = inlined_call_operand.hbm [shape: f32[2,128], index: 12, kind: output, shape index: {0}]
  %s13 = inlined_call_operand.hbm [shape: f32[2,128], index: 13, kind: output, shape index: {1}]
  %14 = xla_tuple %s12, %s13
  %s15 = sld [smem:[#allocation0]]
  $region125: #{tpu_custom_call.1} parent=0
    _
  %s17 = ssub.s32 1, %s15
  %s18 = scalar_select 0, %s17, %s15
  $region1: #{tpu_custom_call.1} parent=0
    #allocation4 [shape = 'u8[8192]{0}', space=vmem, size = 0x2000, scoped, tag = 'input window, operand 0']
    #allocation5 [shape = 's32[2]{0}', space=sflag, size = 0x8, scoped, tag = 'scoped memory for tpu_custom_call.1']
    #allocation6 [shape = 's32[2]{0}', space=sflag, size = 0x8, scoped, tag = 'scoped memory for tpu_custom_call.1']
    #allocation7 [shape = 'u8[4096]{0}', space=vmem, size = 0x1000, scoped, tag = 'input window, operand 1, single buffered']
    #allocation8 [shape = 's32[1]{0}', space=sflag, size = 0x4, scoped, tag = 'scoped memory for tpu_custom_call.1']
    #allocation9 [shape = 'u8[262144]{0}', space=vmem, size = 0x40000, scoped, tag = 'input window, operand 2, single buffered']
    #allocation10 [shape = 'u8[262144]{0}', space=vmem, size = 0x40000, scoped, tag = 'input window, operand 4, single buffered']
    #allocation11 [shape = 's32[1]{0}', space=sflag, size = 0x4, scoped, tag = 'scoped memory for tpu_custom_call.1']
    #allocation12 [shape = 'u8[65536]{0}', space=vmem, size = 0x10000, scoped, tag = 'input window, operand 6, single buffered']
    #allocation13 [shape = 'u8[65536]{0}', space=vmem, size = 0x10000, scoped, tag = 'input window, operand 8, single buffered']
    #allocation14 [shape = 's32[1]{0}', space=sflag, size = 0x4, scoped, tag = 'scoped memory for tpu_custom_call.1']
    #allocation15 [shape = 'u8[65536]{0}', space=vmem, size = 0x10000, scoped, tag = 'input window, operand 10, single buffered']
    #allocation16 [shape = 'u8[1024]{0}', space=vmem, size = 0x400, scoped, tag = 'output window, operand 0, single buffered']
    #allocation17 [shape = 'u8[1024]{0}', space=vmem, size = 0x400, scoped, tag = 'output window, operand 1, single buffered']
    #allocation18 [shape = 's32[1]{0}', space=sflag, size = 0x4, scoped, tag = 'scoped memory for tpu_custom_call.1']
    %19 = vsyncpa [#allocation5], 0
    %s20 = scalar_lea.sflag [#allocation5], 1
    %21 = vsyncpa %s20, 0
    %22 = vsyncpa [#allocation8], 0
    %23 = vsyncpa [#allocation11], 0
    %24 = vsyncpa [#allocation14], 0
    %25 = vsyncpa [#allocation6], 0
    %26 = vsyncpa [#allocation18], 0
    loop: start=0, step=1, limit=4
    $region2: #{tpu_custom_call.1} parent=1 // loop_pre_header
      _
    $region3: #{tpu_custom_call.1} parent=1 // loop_header
      %s28 = sphi 0, %s32
      %p29 = scmp.ge.s32.totalorder %s28, 4
      %s35 = sphi 0, %s47
      %s36 = sphi 0, %s43
      %s37 = sphi 0, %s35
      %s38 = sphi 0, %s36
      %s39 = sphi 0, %s37
      %s40 = sphi 0, %s38
      %s52 = sphi 0, %s54
      %s55 = sphi 0, %s52
      %s56 = sphi 0, %s55
      %s72 = sphi 0, %s56
      %s76 = sphi 0, %s76
      %s78 = sphi 0, %s76
      %s79 = sphi 0, %s78
      %s93 = sphi 0, %s79
      %s97 = sphi 0, %s97
      %s99 = sphi 0, %s97
      %s100 = sphi 0, %s99
      %s114 = sphi 0, %s100
      %s118 = sphi 0, %s118
      %s120 = sphi 0, %s118
      %s121 = sphi 0, %s120
      %s135 = sphi 0, %s121
      %s139 = sphi 0, %s139
      %s141 = sphi 0, %s139
      %s142 = sphi 0, %s141
      %s156 = sphi 0, %s142
      %s160 = sphi 0, %s160
      %s162 = sphi 0, %s160
      %s163 = sphi 0, %s162
      %s177 = sphi 0, %s163
      %s181 = sphi 0, %s181
      %s183 = sphi 0, %s181
      %s184 = sphi 0, %s183
      %s198 = sphi 0, %s184
      %s202 = sphi 0, %s202
      %s204 = sphi 0, %s202
      %s205 = sphi 0, %s204
      %s219 = sphi 0, %s205
      %s223 = sphi 0, %s223
      %s225 = sphi 0, %s223
      %s226 = sphi 0, %s225
      %s240 = sphi 0, %s226
      %s244 = sphi 0, %s244
      %s246 = sphi 0, %s244
      %s247 = sphi 0, %s246
      %s261 = sphi 0, %s247
      %s265 = sphi 0, %s265
      %s267 = sphi 0, %s265
      %s268 = sphi 0, %s267
      %s282 = sphi 0, %s268
      %s286 = sphi 0, %s286
      %s288 = sphi 0, %s286
      %s289 = sphi 0, %s288
      %s303 = sphi 0, %s289
      %s309 = sphi 0, %s311
      %s312 = sphi 0, %s309
      %s313 = sphi 0, %s312
      %s329 = sphi 0, %s313
      %s335 = sphi 0, %s337
      %s338 = sphi 0, %s335
      %s339 = sphi 0, %s338
      %s355 = sphi 0, %s339
    $region4: #{tpu_custom_call.1} parent=1 // loop_header_branch
      %31 = sbr.rel (%p29) target = $region8
    $region5: #{tpu_custom_call.1} parent=1 // loop_body
      %s33 = ssub.s32 %s28, 1
      %s34 = ssub.s32 %s28, 2
      %s41 = sadd.s32 1, %s36
      %p42 = scmp.ge.s32.totalorder %s41, 2
      %s43 = scalar_select %p42, 0, %s41
      %s44 = sadd.s32 1, %s35
      %s45 = scalar_select %p42, %s44, %s35
      %p46 = scmp.ge.s32.totalorder %s45, 1
      %s47 = scalar_select %p46, 0, %s45
      %s48 = ssub.s32 %s35, %s47
      %s49 = ssub.s32 %s36, %s43
      %s50 = sor.u32 %s48, %s49
      %p51 = scmp.eq.s32.totalorder %s50, 0
      %s53 = sadd.s32 %s52, 1
      %s54 = scalar_select %p51, %s52, %s53
      %p57 = pneg %p51
      %p58 = scmp.eq.s32.totalorder %s28, 1
      %p59 = por %p57, %p58
      %p60 = scmp.ne.s32.totalorder %s52, %s55
      %p61 = scmp.eq.s32.totalorder %s28, 0
      %p62 = por %p60, %p61
      %p63 = scmp.ne.s32.totalorder %s52, %s55
      %p64 = scmp.eq.s32.totalorder %s33, 1
      %p65 = por %p63, %p64
      %p66 = scmp.ne.s32.totalorder %s55, %s56
      %p67 = scmp.eq.s32.totalorder %s33, 0
      %p68 = por %p66, %p67
      %p69 = scmp.ne.s32.totalorder %s55, %s56
      %p70 = scmp.eq.s32.totalorder %s34, 1
      %p71 = por %p69, %p70
      %p73 = scmp.ne.s32.totalorder %s56, %s72
      %p74 = scmp.eq.s32.totalorder %s34, 0
      %p75 = por %p73, %p74
      %s77 = sadd.s32 %s76, 1
      %p80 = scmp.eq.s32.totalorder %s28, 1
      %p81 = scmp.ne.s32.totalorder %s76, %s78
      %p82 = scmp.eq.s32.totalorder %s28, 0
      %p83 = por %p81, %p82
      %p84 = scmp.ne.s32.totalorder %s76, %s78
      %p85 = scmp.eq.s32.totalorder %s33, 1
      %p86 = por %p84, %p85
      %p87 = scmp.ne.s32.totalorder %s78, %s79
      %p88 = scmp.eq.s32.totalorder %s33, 0
      %p89 = por %p87, %p88
      %p90 = scmp.ne.s32.totalorder %s78, %s79
      %p91 = scmp.eq.s32.totalorder %s34, 1
      %p92 = por %p90, %p91
      %p94 = scmp.ne.s32.totalorder %s79, %s93
      %p95 = scmp.eq.s32.totalorder %s34, 0
      %p96 = por %p94, %p95
      %s98 = sadd.s32 %s97, 1
      %p101 = scmp.eq.s32.totalorder %s28, 1
      %p102 = scmp.ne.s32.totalorder %s97, %s99
      %p103 = scmp.eq.s32.totalorder %s28, 0
      %p104 = por %p102, %p103
      %p105 = scmp.ne.s32.totalorder %s97, %s99
      %p106 = scmp.eq.s32.totalorder %s33, 1
      %p107 = por %p105, %p106
      %p108 = scmp.ne.s32.totalorder %s99, %s100
      %p109 = scmp.eq.s32.totalorder %s33, 0
      %p110 = por %p108, %p109
      %p111 = scmp.ne.s32.totalorder %s99, %s100
      %p112 = scmp.eq.s32.totalorder %s34, 1
      %p113 = por %p111, %p112
      %p115 = scmp.ne.s32.totalorder %s100, %s114
      %p116 = scmp.eq.s32.totalorder %s34, 0
      %p117 = por %p115, %p116
      %s119 = sadd.s32 %s118, 1
      %p122 = scmp.eq.s32.totalorder %s28, 1
      %p123 = scmp.ne.s32.totalorder %s118, %s120
      %p124 = scmp.eq.s32.totalorder %s28, 0
      %p125 = por %p123, %p124
      %p126 = scmp.ne.s32.totalorder %s118, %s120
      %p127 = scmp.eq.s32.totalorder %s33, 1
      %p128 = por %p126, %p127
      %p129 = scmp.ne.s32.totalorder %s120, %s121
      %p130 = scmp.eq.s32.totalorder %s33, 0
      %p131 = por %p129, %p130
      %p132 = scmp.ne.s32.totalorder %s120, %s121
      %p133 = scmp.eq.s32.totalorder %s34, 1
      %p134 = por %p132, %p133
      %p136 = scmp.ne.s32.totalorder %s121, %s135
      %p137 = scmp.eq.s32.totalorder %s34, 0
      %p138 = por %p136, %p137
      %s140 = sadd.s32 %s139, 1
      %p143 = scmp.eq.s32.totalorder %s28, 1
      %p144 = scmp.ne.s32.totalorder %s139, %s141
      %p145 = scmp.eq.s32.totalorder %s28, 0
      %p146 = por %p144, %p145
      %p147 = scmp.ne.s32.totalorder %s139, %s141
      %p148 = scmp.eq.s32.totalorder %s33, 1
      %p149 = por %p147, %p148
      %p150 = scmp.ne.s32.totalorder %s141, %s142
      %p151 = scmp.eq.s32.totalorder %s33, 0
      %p152 = por %p150, %p151
      %p153 = scmp.ne.s32.totalorder %s141, %s142
      %p154 = scmp.eq.s32.totalorder %s34, 1
      %p155 = por %p153, %p154
      %p157 = scmp.ne.s32.totalorder %s142, %s156
      %p158 = scmp.eq.s32.totalorder %s34, 0
      %p159 = por %p157, %p158
      %s161 = sadd.s32 %s160, 1
      %p164 = scmp.eq.s32.totalorder %s28, 1
      %p165 = scmp.ne.s32.totalorder %s160, %s162
      %p166 = scmp.eq.s32.totalorder %s28, 0
      %p167 = por %p165, %p166
      %p168 = scmp.ne.s32.totalorder %s160, %s162
      %p169 = scmp.eq.s32.totalorder %s33, 1
      %p170 = por %p168, %p169
      %p171 = scmp.ne.s32.totalorder %s162, %s163
      %p172 = scmp.eq.s32.totalorder %s33, 0
      %p173 = por %p171, %p172
      %p174 = scmp.ne.s32.totalorder %s162, %s163
      %p175 = scmp.eq.s32.totalorder %s34, 1
      %p176 = por %p174, %p175
      %p178 = scmp.ne.s32.totalorder %s163, %s177
      %p179 = scmp.eq.s32.totalorder %s34, 0
      %p180 = por %p178, %p179
      %s182 = sadd.s32 %s181, 1
      %p185 = scmp.eq.s32.totalorder %s28, 1
      %p186 = scmp.ne.s32.totalorder %s181, %s183
      %p187 = scmp.eq.s32.totalorder %s28, 0
      %p188 = por %p186, %p187
      %p189 = scmp.ne.s32.totalorder %s181, %s183
      %p190 = scmp.eq.s32.totalorder %s33, 1
      %p191 = por %p189, %p190
      %p192 = scmp.ne.s32.totalorder %s183, %s184
      %p193 = scmp.eq.s32.totalorder %s33, 0
      %p194 = por %p192, %p193
      %p195 = scmp.ne.s32.totalorder %s183, %s184
      %p196 = scmp.eq.s32.totalorder %s34, 1
      %p197 = por %p195, %p196
      %p199 = scmp.ne.s32.totalorder %s184, %s198
      %p200 = scmp.eq.s32.totalorder %s34, 0
      %p201 = por %p199, %p200
      %s203 = sadd.s32 %s202, 1
      %p206 = scmp.eq.s32.totalorder %s28, 1
      %p207 = scmp.ne.s32.totalorder %s202, %s204
      %p208 = scmp.eq.s32.totalorder %s28, 0
      %p209 = por %p207, %p208
      %p210 = scmp.ne.s32.totalorder %s202, %s204
      %p211 = scmp.eq.s32.totalorder %s33, 1
      %p212 = por %p210, %p211
      %p213 = scmp.ne.s32.totalorder %s204, %s205
      %p214 = scmp.eq.s32.totalorder %s33, 0
      %p215 = por %p213, %p214
      %p216 = scmp.ne.s32.totalorder %s204, %s205
      %p217 = scmp.eq.s32.totalorder %s34, 1
      %p218 = por %p216, %p217
      %p220 = scmp.ne.s32.totalorder %s205, %s219
      %p221 = scmp.eq.s32.totalorder %s34, 0
      %p222 = por %p220, %p221
      %s224 = sadd.s32 %s223, 1
      %p227 = scmp.eq.s32.totalorder %s28, 1
      %p228 = scmp.ne.s32.totalorder %s223, %s225
      %p229 = scmp.eq.s32.totalorder %s28, 0
      %p230 = por %p228, %p229
      %p231 = scmp.ne.s32.totalorder %s223, %s225
      %p232 = scmp.eq.s32.totalorder %s33, 1
      %p233 = por %p231, %p232
      %p234 = scmp.ne.s32.totalorder %s225, %s226
      %p235 = scmp.eq.s32.totalorder %s33, 0
      %p236 = por %p234, %p235
      %p237 = scmp.ne.s32.totalorder %s225, %s226
      %p238 = scmp.eq.s32.totalorder %s34, 1
      %p239 = por %p237, %p238
      %p241 = scmp.ne.s32.totalorder %s226, %s240
      %p242 = scmp.eq.s32.totalorder %s34, 0
      %p243 = por %p241, %p242
      %s245 = sadd.s32 %s244, 1
      %p248 = scmp.eq.s32.totalorder %s28, 1
      %p249 = scmp.ne.s32.totalorder %s244, %s246
      %p250 = scmp.eq.s32.totalorder %s28, 0
      %p251 = por %p249, %p250
      %p252 = scmp.ne.s32.totalorder %s244, %s246
      %p253 = scmp.eq.s32.totalorder %s33, 1
      %p254 = por %p252, %p253
      %p255 = scmp.ne.s32.totalorder %s246, %s247
      %p256 = scmp.eq.s32.totalorder %s33, 0
      %p257 = por %p255, %p256
      %p258 = scmp.ne.s32.totalorder %s246, %s247
      %p259 = scmp.eq.s32.totalorder %s34, 1
      %p260 = por %p258, %p259
      %p262 = scmp.ne.s32.totalorder %s247, %s261
      %p263 = scmp.eq.s32.totalorder %s34, 0
      %p264 = por %p262, %p263
      %s266 = sadd.s32 %s265, 1
      %p269 = scmp.eq.s32.totalorder %s28, 1
      %p270 = scmp.ne.s32.totalorder %s265, %s267
      %p271 = scmp.eq.s32.totalorder %s28, 0
      %p272 = por %p270, %p271
      %p273 = scmp.ne.s32.totalorder %s265, %s267
      %p274 = scmp.eq.s32.totalorder %s33, 1
      %p275 = por %p273, %p274
      %p276 = scmp.ne.s32.totalorder %s267, %s268
      %p277 = scmp.eq.s32.totalorder %s33, 0
      %p278 = por %p276, %p277
      %p279 = scmp.ne.s32.totalorder %s267, %s268
      %p280 = scmp.eq.s32.totalorder %s34, 1
      %p281 = por %p279, %p280
      %p283 = scmp.ne.s32.totalorder %s268, %s282
      %p284 = scmp.eq.s32.totalorder %s34, 0
      %p285 = por %p283, %p284
      %s287 = sadd.s32 %s286, 1
      %p290 = scmp.eq.s32.totalorder %s28, 1
      %p291 = scmp.ne.s32.totalorder %s286, %s288
      %p292 = scmp.eq.s32.totalorder %s28, 0
      %p293 = por %p291, %p292
      %p294 = scmp.ne.s32.totalorder %s286, %s288
      %p295 = scmp.eq.s32.totalorder %s33, 1
      %p296 = por %p294, %p295
      %p297 = scmp.ne.s32.totalorder %s288, %s289
      %p298 = scmp.eq.s32.totalorder %s33, 0
      %p299 = por %p297, %p298
      %p300 = scmp.ne.s32.totalorder %s288, %s289
      %p301 = scmp.eq.s32.totalorder %s34, 1
      %p302 = por %p300, %p301
      %p304 = scmp.ne.s32.totalorder %s289, %s303
      %p305 = scmp.eq.s32.totalorder %s34, 0
      %p306 = por %p304, %p305
      %s307 = ssub.s32 %s35, %s47
      %p308 = scmp.eq.s32.totalorder %s307, 0
      %s310 = sadd.s32 %s309, 1
      %s311 = scalar_select %p308, %s309, %s310
      %p314 = pneg %p308
      %p315 = scmp.eq.s32.totalorder %s28, 1
      %p316 = por %p314, %p315
      %p317 = scmp.ne.s32.totalorder %s309, %s312
      %p318 = scmp.eq.s32.totalorder %s28, 0
      %p319 = por %p317, %p318
      %p320 = scmp.ne.s32.totalorder %s309, %s312
      %p321 = scmp.eq.s32.totalorder %s33, 1
      %p322 = por %p320, %p321
      %p323 = scmp.ne.s32.totalorder %s312, %s313
      %p324 = scmp.eq.s32.totalorder %s33, 0
      %p325 = por %p323, %p324
      %p326 = scmp.ne.s32.totalorder %s312, %s313
      %p327 = scmp.eq.s32.totalorder %s34, 1
      %p328 = por %p326, %p327
      %p330 = scmp.ne.s32.totalorder %s313, %s329
      %p331 = scmp.eq.s32.totalorder %s34, 0
      %p332 = por %p330, %p331
      %s333 = ssub.s32 %s35, %s47
      %p334 = scmp.eq.s32.totalorder %s333, 0
      %s336 = sadd.s32 %s335, 1
      %s337 = scalar_select %p334, %s335, %s336
      %p340 = pneg %p334
      %p341 = scmp.eq.s32.totalorder %s28, 1
      %p342 = por %p340, %p341
      %p343 = scmp.ne.s32.totalorder %s335, %s338
      %p344 = scmp.eq.s32.totalorder %s28, 0
      %p345 = por %p343, %p344
      %p346 = scmp.ne.s32.totalorder %s335, %s338
      %p347 = scmp.eq.s32.totalorder %s33, 1
      %p348 = por %p346, %p347
      %p349 = scmp.ne.s32.totalorder %s338, %s339
      %p350 = scmp.eq.s32.totalorder %s33, 0
      %p351 = por %p349, %p350
      %p352 = scmp.ne.s32.totalorder %s338, %s339
      %p353 = scmp.eq.s32.totalorder %s34, 1
      %p354 = por %p352, %p353
      %p356 = scmp.ne.s32.totalorder %s339, %s355
      %p357 = scmp.eq.s32.totalorder %s34, 0
      %p358 = por %p356, %p357
      %p359 = scmp.le.s32.totalorder 1, %s28
      %p360 = scmp.lt.s32.totalorder %s28, 3
      %p361 = pnand %p359, %p360
      %p362 = pneg %p361
      // Predicated region
      $region9: #{tpu_custom_call.1} parent=5 // pred_check
        _
      $region10: #{tpu_custom_call.1} parent=5 // pred_check_branch
        %364 = sbr.rel (%p361) target = $region12
      $region11: #{tpu_custom_call.1} parent=5 // pred_region
        %s365 = ssub.s32 %s28, 1
        // Predicated region
        $region13: #{tpu_custom_call.1} parent=11 // pred_check
          %p366 = pneg %p89
        $region14: #{tpu_custom_call.1} parent=11 // pred_check_branch
          %368 = sbr.rel (%p366) target = $region16
        $region15: #{tpu_custom_call.1} parent=11 // pred_region
          %s370 = ssub.s32 128, 128
          %371 = vsyncadd [#allocation8], %s370
          %s373 = sshll.u32 [#allocation7], 4
          %s374 = int_to_ptr.vmem [resolvable:$true] %s373
          %376 = dma.hbm_to_vmem [thread:$0]  %s1, 128, %s374, [#allocation8]
        $region16: #{tpu_custom_call.1} parent=11 // pred_fallthru
          _
        // Predicated region
        $region17: #{tpu_custom_call.1} parent=11 // pred_check
          %p377 = pneg %p110
        $region18: #{tpu_custom_call.1} parent=11 // pred_check_branch
          %379 = sbr.rel (%p377) target = $region20
        $region19: #{tpu_custom_call.1} parent=11 // pred_region
          %s381 = ssub.s32 8192, 8192
          %382 = vsyncadd [#allocation8], %s381
          %s383 = sshll.u32 [#allocation9], 4
          %s384 = int_to_ptr.vmem [resolvable:$true] %s383
          %389 = dma.hbm_to_vmem [thread:$0]  %s2, 8192, %s384, [#allocation8], 512, 512, 32
        $region20: #{tpu_custom_call.1} parent=11 // pred_fallthru
          _
        // Predicated region
        $region21: #{tpu_custom_call.1} parent=11 // pred_check
          %p390 = pneg %p131
        $region22: #{tpu_custom_call.1} parent=11 // pred_check_branch
          %392 = sbr.rel (%p390) target = $region24
        $region23: #{tpu_custom_call.1} parent=11 // pred_region
          _
        $region24: #{tpu_custom_call.1} parent=11 // pred_fallthru
          _
        // Predicated region
        $region25: #{tpu_custom_call.1} parent=11 // pred_check
          %p393 = pneg %p152
        $region26: #{tpu_custom_call.1} parent=11 // pred_check_branch
          %395 = sbr.rel (%p393) target = $region28
        $region27: #{tpu_custom_call.1} parent=11 // pred_region
          %s397 = ssub.s32 8192, 8192
          %398 = vsyncadd [#allocation11], %s397
          %s399 = sshll.u32 [#allocation10], 4
          %s400 = int_to_ptr.vmem [resolvable:$true] %s399
          %405 = dma.hbm_to_vmem [thread:$0]  %s4, 8192, %s400, [#allocation11], 128, 128, 8
        $region28: #{tpu_custom_call.1} parent=11 // pred_fallthru
          _
        // Predicated region
        $region29: #{tpu_custom_call.1} parent=11 // pred_check
          %p406 = pneg %p173
        $region30: #{tpu_custom_call.1} parent=11 // pred_check_branch
          %408 = sbr.rel (%p406) target = $region32
        $region31: #{tpu_custom_call.1} parent=11 // pred_region
          _
        $region32: #{tpu_custom_call.1} parent=11 // pred_fallthru
          _
        // Predicated region
        $region33: #{tpu_custom_call.1} parent=11 // pred_check
          %p409 = pneg %p194
        $region34: #{tpu_custom_call.1} parent=11 // pred_check_branch
          %411 = sbr.rel (%p409) target = $region36
        $region35: #{tpu_custom_call.1} parent=11 // pred_region
          %s413 = ssub.s32 2048, 2048
          %414 = vsyncadd [#allocation11], %s413
          %s415 = sshll.u32 [#allocation12], 4
          %s416 = int_to_ptr.vmem [resolvable:$true] %s415
          %421 = dma.hbm_to_vmem [thread:$0]  %s6, 2048, %s416, [#allocation11], 128, 128, 8
        $region36: #{tpu_custom_call.1} parent=11 // pred_fallthru
          _
        // Predicated region
        $region37: #{tpu_custom_call.1} parent=11 // pred_check
          %p422 = pneg %p215
        $region38: #{tpu_custom_call.1} parent=11 // pred_check_branch
          %424 = sbr.rel (%p422) target = $region40
        $region39: #{tpu_custom_call.1} parent=11 // pred_region
          _
        $region40: #{tpu_custom_call.1} parent=11 // pred_fallthru
          _
        // Predicated region
        $region41: #{tpu_custom_call.1} parent=11 // pred_check
          %p425 = pneg %p236
        $region42: #{tpu_custom_call.1} parent=11 // pred_check_branch
          %427 = sbr.rel (%p425) target = $region44
        $region43: #{tpu_custom_call.1} parent=11 // pred_region
          %s429 = ssub.s32 2048, 2048
          %430 = vsyncadd [#allocation14], %s429
          %s431 = sshll.u32 [#allocation13], 4
          %s432 = int_to_ptr.vmem [resolvable:$true] %s431
          %437 = dma.hbm_to_vmem [thread:$0]  %s8, 2048, %s432, [#allocation14], 128, 128, 8
        $region44: #{tpu_custom_call.1} parent=11 // pred_fallthru
          _
        // Predicated region
        $region45: #{tpu_custom_call.1} parent=11 // pred_check
          %p438 = pneg %p257
        $region46: #{tpu_custom_call.1} parent=11 // pred_check_branch
          %440 = sbr.rel (%p438) target = $region48
        $region47: #{tpu_custom_call.1} parent=11 // pred_region
          _
        $region48: #{tpu_custom_call.1} parent=11 // pred_fallthru
          _
        // Predicated region
        $region49: #{tpu_custom_call.1} parent=11 // pred_check
          %p441 = pneg %p278
        $region50: #{tpu_custom_call.1} parent=11 // pred_check_branch
          %443 = sbr.rel (%p441) target = $region52
        $region51: #{tpu_custom_call.1} parent=11 // pred_region
          %s445 = ssub.s32 2048, 2048
          %446 = vsyncadd [#allocation14], %s445
          %s447 = sshll.u32 [#allocation15], 4
          %s448 = int_to_ptr.vmem [resolvable:$true] %s447
          %453 = dma.hbm_to_vmem [thread:$0]  %s10, 2048, %s448, [#allocation14], 128, 128, 8
        $region52: #{tpu_custom_call.1} parent=11 // pred_fallthru
          _
        // Predicated region
        $region53: #{tpu_custom_call.1} parent=11 // pred_check
          %p454 = pneg %p299
        $region54: #{tpu_custom_call.1} parent=11 // pred_check_branch
          %456 = sbr.rel (%p454) target = $region56
        $region55: #{tpu_custom_call.1} parent=11 // pred_region
          _
        $region56: #{tpu_custom_call.1} parent=11 // pred_fallthru
          _
      $region12: #{tpu_custom_call.1} parent=5 // pred_fallthru
        _
      %p457 = scmp.lt.s32.totalorder %s28, 2
      // Predicated region
      $region57: #{tpu_custom_call.1} parent=5 // pred_check
        %p458 = pneg %p457
      $region58: #{tpu_custom_call.1} parent=5 // pred_check_branch
        %460 = sbr.rel (%p458) target = $region60
      $region59: #{tpu_custom_call.1} parent=5 // pred_region
        // Predicated region
        $region61: #{tpu_custom_call.1} parent=59 // pred_check
          %p461 = pneg %p62
        $region62: #{tpu_custom_call.1} parent=59 // pred_check_branch
          %463 = sbr.rel (%p461) target = $region64
        $region63: #{tpu_custom_call.1} parent=59 // pred_region
          %s464 = sand.u32 %s52, 1
          %s465 = scalar_lea.sflag [#allocation5], %s464
          %s466 = sand.u32 %s52, 1
          %s467 = smul.addr %s466, 8
          %s468 = scalar_lea.vmem [#allocation4], %s467
          %s470 = ssub.s32 128, 128
          %471 = vsyncadd %s465, %s470
          %s472 = smul.addr %s35, 2
          %s473 = sadd.s32 %s36, %s472
          %s474 = smul.addr %s473, 128
          %s475 = scalar_lea.hbm %s0, %s474
          %s477 = sshll.u32 %s468, 4
          %s478 = int_to_ptr.vmem [resolvable:$true] %s477
          %480 = dma.hbm_to_vmem [thread:$0]  %s475, 128, %s478, %s465
        $region64: #{tpu_custom_call.1} parent=59 // pred_fallthru
          _
      $region60: #{tpu_custom_call.1} parent=5 // pred_fallthru
        _
      %p481 = scmp.le.s32.totalorder 1, %s28
      %p482 = scmp.lt.s32.totalorder %s28, 3
      %p483 = pnand %p481, %p482
      %p484 = pneg %p483
      // Predicated region
      $region65: #{tpu_custom_call.1} parent=5 // pred_check
        _
      $region66: #{tpu_custom_call.1} parent=5 // pred_check_branch
        %486 = sbr.rel (%p483) target = $region68
      $region67: #{tpu_custom_call.1} parent=5 // pred_region
        %s487 = ssub.s32 %s28, 1
        %s488 = sand.u32 %s55, 1
        %s489 = scalar_lea.sflag [#allocation5], %s488
        %s490 = sand.u32 %s55, 1
        %s491 = smul.addr %s490, 8
        %s492 = scalar_lea.vmem [#allocation4], %s491
        // Predicated region
        $region69: #{tpu_custom_call.1} parent=67 // pred_check
          %p493 = pneg %p68
        $region70: #{tpu_custom_call.1} parent=67 // pred_check_branch
          %495 = sbr.rel (%p493) target = $region72
        $region71: #{tpu_custom_call.1} parent=67 // pred_region
          %496 = dma.done %s489, 128
        $region72: #{tpu_custom_call.1} parent=67 // pred_fallthru
          _
        // Predicated region
        $region73: #{tpu_custom_call.1} parent=67 // pred_check
          %p497 = pneg %p89
        $region74: #{tpu_custom_call.1} parent=67 // pred_check_branch
          %499 = sbr.rel (%p497) target = $region76
        $region75: #{tpu_custom_call.1} parent=67 // pred_region
          %500 = dma.done [#allocation8], 128
        $region76: #{tpu_custom_call.1} parent=67 // pred_fallthru
          _
        // Predicated region
        $region77: #{tpu_custom_call.1} parent=67 // pred_check
          %p501 = pneg %p110
        $region78: #{tpu_custom_call.1} parent=67 // pred_check_branch
          %503 = sbr.rel (%p501) target = $region80
        $region79: #{tpu_custom_call.1} parent=67 // pred_region
          %504 = dma.done [#allocation8], 8192
        $region80: #{tpu_custom_call.1} parent=67 // pred_fallthru
          _
        // Predicated region
        $region81: #{tpu_custom_call.1} parent=67 // pred_check
          %p505 = pneg %p152
        $region82: #{tpu_custom_call.1} parent=67 // pred_check_branch
          %507 = sbr.rel (%p505) target = $region84
        $region83: #{tpu_custom_call.1} parent=67 // pred_region
          %508 = dma.done [#allocation11], 8192
        $region84: #{tpu_custom_call.1} parent=67 // pred_fallthru
          _
        // Predicated region
        $region85: #{tpu_custom_call.1} parent=67 // pred_check
          %p509 = pneg %p194
        $region86: #{tpu_custom_call.1} parent=67 // pred_check_branch
          %511 = sbr.rel (%p509) target = $region88
        $region87: #{tpu_custom_call.1} parent=67 // pred_region
          %512 = dma.done [#allocation11], 2048
        $region88: #{tpu_custom_call.1} parent=67 // pred_fallthru
          _
        // Predicated region
        $region89: #{tpu_custom_call.1} parent=67 // pred_check
          %p513 = pneg %p236
        $region90: #{tpu_custom_call.1} parent=67 // pred_check_branch
          %515 = sbr.rel (%p513) target = $region92
        $region91: #{tpu_custom_call.1} parent=67 // pred_region
          %516 = dma.done [#allocation14], 2048
        $region92: #{tpu_custom_call.1} parent=67 // pred_fallthru
          _
        // Predicated region
        $region93: #{tpu_custom_call.1} parent=67 // pred_check
          %p517 = pneg %p278
        $region94: #{tpu_custom_call.1} parent=67 // pred_check_branch
          %519 = sbr.rel (%p517) target = $region96
        $region95: #{tpu_custom_call.1} parent=67 // pred_region
          %520 = dma.done [#allocation14], 2048
        $region96: #{tpu_custom_call.1} parent=67 // pred_fallthru
          _
        %s521 = sand.u32 %s55, 1
        %s522 = scalar_lea.sflag [#allocation5], %s521
        %s523 = sand.u32 %s55, 1
        %s524 = smul.addr %s523, 8
        %s525 = scalar_lea.vmem [#allocation4], %s524
        %p526 = pneg %p68
        %p527 = pneg %p65
        %p528 = pneg %p89
        %p529 = pneg %p86
        %p530 = pneg %p110
        %p531 = pneg %p107
        %p532 = pneg %p131
        %p533 = pneg %p128
        %p534 = pneg %p152
        %p535 = pneg %p149
        %p536 = pneg %p173
        %p537 = pneg %p170
        %p538 = pneg %p194
        %p539 = pneg %p191
        %p540 = pneg %p215
        %p541 = pneg %p212
        %p542 = pneg %p236
        %p543 = pneg %p233
        %p544 = pneg %p257
        %p545 = pneg %p254
        %p546 = pneg %p278
        %p547 = pneg %p275
        %p548 = pneg %p299
        %p549 = pneg %p296
        %p550 = pneg %p325
        %p551 = pneg %p322
        %p552 = pneg %p351
        %p553 = pneg %p348
        %p554 = scmp.eq.s32.totalorder %s38, 0
        // Predicated region
        $region97: #{tpu_custom_call.1} parent=67 // pred_check
          %p555 = pneg %p554
        $region98: #{tpu_custom_call.1} parent=67 // pred_check_branch
          %557 = sbr.rel (%p555) target = $region100
        $region99: #{tpu_custom_call.1} parent=67 // pred_region
          %558 = vst [vmem:[#allocation2] sm:$0xff] 0.0
          %559 = vst [vmem:[#allocation3] sm:$0xff] 1.0
          %560 = vst [vmem:[#allocation3 + $0x8] sm:$0xff] 1.0
          %561 = vst [vmem:[#allocation3 + $0x10] sm:$0xff] 1.0
          %562 = vst [vmem:[#allocation3 + $0x18] sm:$0xff] 1.0
          %563 = vst [vmem:[#allocation3 + $0x20] sm:$0xff] 1.0
          %564 = vst [vmem:[#allocation3 + $0x28] sm:$0xff] 1.0
          %565 = vst [vmem:[#allocation3 + $0x30] sm:$0xff] 1.0
          %566 = vst [vmem:[#allocation3 + $0x38] sm:$0xff] 1.0
          %567 = vst [vmem:[#allocation3 + $0x40] sm:$0xff] 1.0
          %568 = vst [vmem:[#allocation3 + $0x48] sm:$0xff] 1.0
          %569 = vst [vmem:[#allocation3 + $0x50] sm:$0xff] 1.0
          %570 = vst [vmem:[#allocation3 + $0x58] sm:$0xff] 1.0
          %571 = vst [vmem:[#allocation3 + $0x60] sm:$0xff] 1.0
          %572 = vst [vmem:[#allocation3 + $0x68] sm:$0xff] 1.0
          %573 = vst [vmem:[#allocation3 + $0x70] sm:$0xff] 1.0
          %574 = vst [vmem:[#allocation3 + $0x78] sm:$0xff] 1.0
        $region100: #{tpu_custom_call.1} parent=67 // pred_fallthru
          _
        %v575 = vld [vmem:[#allocation2] sm:$0xff]
        %v576 = vld [vmem:[%s492] sm:$0xff]
        %v577 = vld [vmem:[#allocation3] sm:$0xff]
        %v578 = vld [vmem:[#allocation3 + $0x8] sm:$0xff]
        %v579 = vld [vmem:[#allocation3 + $0x10] sm:$0xff]
        %v580 = vld [vmem:[#allocation3 + $0x18] sm:$0xff]
        %v581 = vld [vmem:[#allocation3 + $0x20] sm:$0xff]
        %v582 = vld [vmem:[#allocation3 + $0x28] sm:$0xff]
        %v583 = vld [vmem:[#allocation3 + $0x30] sm:$0xff]
        %v584 = vld [vmem:[#allocation3 + $0x38] sm:$0xff]
        %v585 = vld [vmem:[#allocation3 + $0x40] sm:$0xff]
        %v586 = vld [vmem:[#allocation3 + $0x48] sm:$0xff]
        %v587 = vld [vmem:[#allocation3 + $0x50] sm:$0xff]
        %v588 = vld [vmem:[#allocation3 + $0x58] sm:$0xff]
        %v589 = vld [vmem:[#allocation3 + $0x60] sm:$0xff]
        %v590 = vld [vmem:[#allocation3 + $0x68] sm:$0xff]
        %v591 = vld [vmem:[#allocation3 + $0x70] sm:$0xff]
        %v592 = vld [vmem:[#allocation3 + $0x78] sm:$0xff]
        %593 = vmatprep.subr.mxu0 0.0
        %594 = vmatpush1.msra.mxu0 %v577
        %595 = vmatprep.subr.mxu0 0.0
        %596 = vmatpush1.msra.mxu0 %v578
        %597 = vmatprep.subr.mxu0 0.0
        %598 = vmatpush1.msra.mxu0 %v579
        %599 = vmatprep.subr.mxu0 0.0
        %600 = vmatpush1.msra.mxu0 %v580
        %601 = vmatprep.subr.mxu0 0.0
        %602 = vmatpush1.msra.mxu0 %v581
        %603 = vmatprep.subr.mxu0 0.0
        %604 = vmatpush1.msra.mxu0 %v582
        %605 = vmatprep.subr.mxu0 0.0
        %606 = vmatpush1.msra.mxu0 %v583
        %607 = vmatprep.subr.mxu0 0.0
        %608 = vmatpush1.msra.mxu0 %v584
        %609 = vmatprep.subr.mxu0 0.0
        %610 = vmatpush1.msra.mxu0 %v585
        %611 = vmatprep.subr.mxu0 0.0
        %612 = vmatpush1.msra.mxu0 %v586
        %613 = vmatprep.subr.mxu0 0.0
        %614 = vmatpush1.msra.mxu0 %v587
        %615 = vmatprep.subr.mxu0 0.0
        %616 = vmatpush1.msra.mxu0 %v588
        %617 = vmatprep.subr.mxu0 0.0
        %618 = vmatpush1.msra.mxu0 %v589
        %619 = vmatprep.subr.mxu0 0.0
        %620 = vmatpush1.msra.mxu0 %v590
        %621 = vmatprep.subr.mxu0 0.0
        %622 = vmatpush1.msra.mxu0 %v591
        %623 = vmatprep.subr.mxu0 0.0
        %624 = vmatpush1.msra.mxu0 %v592
        %625 = vmatprep.subr.mxu0 0.0
        %626 = vmatpush1.msra.mxu0 0.0
        %627 = vmatprep.subr.mxu0 0.0
        %628 = vmatpush1.msra.mxu0 0.0
        %629 = vmatprep.subr.mxu0 0.0
        %630 = vmatpush1.msra.mxu0 0.0
        %631 = vmatprep.subr.mxu0 0.0
        %632 = vmatpush1.msra.mxu0 0.0
        %633 = vmatprep.subr.mxu0 0.0
        %634 = vmatpush1.msra.mxu0 0.0
        %635 = vmatprep.subr.mxu0 0.0
        %636 = vmatpush1.msra.mxu0 0.0
        %637 = vmatprep.subr.mxu0 0.0
        %638 = vmatpush1.msra.mxu0 0.0
        %639 = vmatprep.subr.mxu0 0.0
        %640 = vmatpush1.msra.mxu0 0.0
        %641 = vmatprep.subr.mxu0 0.0
        %642 = vmatpush1.msra.mxu0 0.0
        %643 = vmatprep.subr.mxu0 0.0
        %644 = vmatpush1.msra.mxu0 0.0
        %645 = vmatprep.subr.mxu0 0.0
        %646 = vmatpush1.msra.mxu0 0.0
        %647 = vmatprep.subr.mxu0 0.0
        %648 = vmatpush1.msra.mxu0 0.0
        %649 = vmatprep.subr.mxu0 0.0
        %650 = vmatpush1.msra.mxu0 0.0
        %651 = vmatprep.subr.mxu0 0.0
        %652 = vmatpush1.msra.mxu0 0.0
        %653 = vmatprep.subr.mxu0 0.0
        %654 = vmatpush1.msra.mxu0 0.0
        %655 = vmatprep.subr.mxu0 0.0
        %656 = vmatpush1.msra.mxu0 0.0
        %657 = vmatprep.mubr.f32.mxu0 0.0
        %658 = vmatmul.mubr.f32.gmra.mrb[0].mxu0 %v576
        %v659 = vpop.f32.mrb[0].mxu0
        %v660 = vadd.f32 0.0, %v659
        %v661 = vpop.f32.mrb[0].mxu0
        %662 = vdwg.mxu0
        %v663 = vadd.f32 %v575, %v660
        %664 = vst [vmem:[#allocation2] sm:$0xff] %v663
        %p665 = scmp.eq.s32.totalorder %s38, 1
        // Predicated region
        $region101: #{tpu_custom_call.1} parent=67 // pred_check
          %p666 = pneg %p665
        $region102: #{tpu_custom_call.1} parent=67 // pred_check_branch
          %668 = sbr.rel (%p666) target = $region104
        $region103: #{tpu_custom_call.1} parent=67 // pred_region
          %v669 = vld [vmem:[#allocation2] sm:$0xff]
          %v670 = vld [vmem:[#allocation7] sm:$0xff]
          %v671 = vmul.f32 %v669, %v670
          %v672 = vlaneseq
          %v673 = vshrl.u32 %v672, 7
          %v674 = vlaneseq
          %v675 = vand.u32 %v674, 127
          %v676 = vmul.u32 %v673, 4
          %vm677 = vcmp.ge.s32.totalorder %v675, %v676
          %v678 = vadd.s32 %v673, 1
          %v679 = vmul.u32 %v678, 4
          %vm680 = vcmp.lt.s32.totalorder %v675, %v679
          %vm681 = vmand %vm677, %vm680
          %v682 = vsel %vm681, 1, 0
          %v683 = vcvt.s32.f32 %v682
          %vm684 = vcmask 64512
          %v686 = vsel %vm684, %v683, 0
          %688 = vmatprep.subr.mxu0 0.0
          %689 = vmatpush1.msra.mxu0 %v671
          %690 = vmatprep.subr.mxu0 0.0
          %691 = vmatpush1.msra.mxu0 0.0
          %692 = vmatprep.subr.mxu0 0.0
          %693 = vmatpush1.msra.mxu0 0.0
          %694 = vmatprep.subr.mxu0 0.0
          %695 = vmatpush1.msra.mxu0 0.0
          %696 = vmatprep.subr.mxu0 0.0
          %697 = vmatpush1.msra.mxu0 0.0
          %698 = vmatprep.subr.mxu0 0.0
          %699 = vmatpush1.msra.mxu0 0.0
          %700 = vmatprep.subr.mxu0 0.0
          %701 = vmatpush1.msra.mxu0 0.0
          %702 = vmatprep.subr.mxu0 0.0
          %703 = vmatpush1.msra.mxu0 0.0
          %704 = vmatprep.subr.mxu0 0.0
          %705 = vmatpush1.msra.mxu0 0.0
          %706 = vmatprep.subr.mxu0 0.0
          %707 = vmatpush1.msra.mxu0 0.0
          %708 = vmatprep.subr.mxu0 0.0
          %709 = vmatpush1.msra.mxu0 0.0
          %710 = vmatprep.subr.mxu0 0.0
          %711 = vmatpush1.msra.mxu0 0.0
          %712 = vmatprep.subr.mxu0 0.0
          %713 = vmatpush1.msra.mxu0 0.0
          %714 = vmatprep.subr.mxu0 0.0
          %715 = vmatpush1.msra.mxu0 0.0
          %716 = vmatprep.subr.mxu0 0.0
          %717 = vmatpush1.msra.mxu0 0.0
          %718 = vmatprep.subr.mxu0 0.0
          %719 = vmatpush1.msra.mxu0 0.0
          %720 = vmatprep.subr.mxu0 0.0
          %721 = vmatpush1.msra.mxu0 0.0
          %722 = vmatprep.subr.mxu0 0.0
          %723 = vmatpush1.msra.mxu0 0.0
          %724 = vmatprep.subr.mxu0 0.0
          %725 = vmatpush1.msra.mxu0 0.0
          %726 = vmatprep.subr.mxu0 0.0
          %727 = vmatpush1.msra.mxu0 0.0
          %728 = vmatprep.subr.mxu0 0.0
          %729 = vmatpush1.msra.mxu0 0.0
          %730 = vmatprep.subr.mxu0 0.0
          %731 = vmatpush1.msra.mxu0 0.0
          %732 = vmatprep.subr.mxu0 0.0
          %733 = vmatpush1.msra.mxu0 0.0
          %734 = vmatprep.subr.mxu0 0.0
          %735 = vmatpush1.msra.mxu0 0.0
          %736 = vmatprep.subr.mxu0 0.0
          %737 = vmatpush1.msra.mxu0 0.0
          %738 = vmatprep.subr.mxu0 0.0
          %739 = vmatpush1.msra.mxu0 0.0
          %740 = vmatprep.subr.mxu0 0.0
          %741 = vmatpush1.msra.mxu0 0.0
          %742 = vmatprep.subr.mxu0 0.0
          %743 = vmatpush1.msra.mxu0 0.0
          %744 = vmatprep.subr.mxu0 0.0
          %745 = vmatpush1.msra.mxu0 0.0
          %746 = vmatprep.subr.mxu0 0.0
          %747 = vmatpush1.msra.mxu0 0.0
          %748 = vmatprep.subr.mxu0 0.0
          %749 = vmatpush1.msra.mxu0 0.0
          %750 = vmatprep.subr.mxu0 0.0
          %751 = vmatpush1.msra.mxu0 0.0
          %752 = vmatprep.mubr.f32.mxu0 0.0
          %753 = vmatmul.mubr.f32.gmra.mrb[0].mxu0 %v686
          %v754 = vpop.f32.mrb[0].mxu0
          %v755 = vadd.f32 0.0, %v754
          %v756 = vpop.f32.mrb[0].mxu0
          %757 = vdwg.mxu0
          %v758 = vmul.f32 %v755, 0.00390625
          %v759 = vld [vmem:[#allocation9] sm:$0xff]
          %v760 = vld [vmem:[#allocation9 + $0x8] sm:$0xff]
          %v761 = vld [vmem:[#allocation9 + $0x10] sm:$0xff]
          %v762 = vld [vmem:[#allocation9 + $0x18] sm:$0xff]
          %v763 = vld [vmem:[#allocation9 + $0x20] sm:$0xff]
          %v764 = vld [vmem:[#allocation9 + $0x28] sm:$0xff]
          %v765 = vld [vmem:[#allocation9 + $0x30] sm:$0xff]
          %v766 = vld [vmem:[#allocation9 + $0x38] sm:$0xff]
          %v767 = vld [vmem:[#allocation9 + $0x40] sm:$0xff]
          %v768 = vld [vmem:[#allocation9 + $0x48] sm:$0xff]
          %v769 = vld [vmem:[#allocation9 + $0x50] sm:$0xff]
          %v770 = vld [vmem:[#allocation9 + $0x58] sm:$0xff]
          %v771 = vld [vmem:[#allocation9 + $0x60] sm:$0xff]
          %v772 = vld [vmem:[#allocation9 + $0x68] sm:$0xff]
          %v773 = vld [vmem:[#allocation9 + $0x70] sm:$0xff]
          %v774 = vld [vmem:[#allocation9 + $0x78] sm:$0xff]
          %v775 = vld [vmem:[#allocation9 + $0x80] sm:$0xff]
          %v776 = vld [vmem:[#allocation9 + $0x88] sm:$0xff]
          %v777 = vld [vmem:[#allocation9 + $0x90] sm:$0xff]
          %v778 = vld [vmem:[#allocation9 + $0x98] sm:$0xff]
          %v779 = vld [vmem:[#allocation9 + $0xa0] sm:$0xff]
          %v780 = vld [vmem:[#allocation9 + $0xa8] sm:$0xff]
          %v781 = vld [vmem:[#allocation9 + $0xb0] sm:$0xff]
          %v782 = vld [vmem:[#allocation9 + $0xb8] sm:$0xff]
          %v783 = vld [vmem:[#allocation9 + $0xc0] sm:$0xff]
          %v784 = vld [vmem:[#allocation9 + $0xc8] sm:$0xff]
          %v785 = vld [vmem:[#allocation9 + $0xd0] sm:$0xff]
          %v786 = vld [vmem:[#allocation9 + $0xd8] sm:$0xff]
          %v787 = vld [vmem:[#allocation9 + $0xe0] sm:$0xff]
          %v788 = vld [vmem:[#allocation9 + $0xe8] sm:$0xff]
          %v789 = vld [vmem:[#allocation9 + $0xf0] sm:$0xff]
          %v790 = vld [vmem:[#allocation9 + $0xf8] sm:$0xff]
          %v791 = vld [vmem:[#allocation9 + $0x100] sm:$0xff]
          %v792 = vld [vmem:[#allocation9 + $0x108] sm:$0xff]
          %v793 = vld [vmem:[#allocation9 + $0x110] sm:$0xff]
          %v794 = vld [vmem:[#allocation9 + $0x118] sm:$0xff]
          %v795 = vld [vmem:[#allocation9 + $0x120] sm:$0xff]
          %v796 = vld [vmem:[#allocation9 + $0x128] sm:$0xff]
          %v797 = vld [vmem:[#allocation9 + $0x130] sm:$0xff]
          %v798 = vld [vmem:[#allocation9 + $0x138] sm:$0xff]
          %v799 = vld [vmem:[#allocation9 + $0x140] sm:$0xff]
          %v800 = vld [vmem:[#allocation9 + $0x148] sm:$0xff]
          %v801 = vld [vmem:[#allocation9 + $0x150] sm:$0xff]
          %v802 = vld [vmem:[#allocation9 + $0x158] sm:$0xff]
          %v803 = vld [vmem:[#allocation9 + $0x160] sm:$0xff]
          %v804 = vld [vmem:[#allocation9 + $0x168] sm:$0xff]
          %v805 = vld [vmem:[#allocation9 + $0x170] sm:$0xff]
          %v806 = vld [vmem:[#allocation9 + $0x178] sm:$0xff]
          %v807 = vld [vmem:[#allocation9 + $0x180] sm:$0xff]
          %v808 = vld [vmem:[#allocation9 + $0x188] sm:$0xff]
          %v809 = vld [vmem:[#allocation9 + $0x190] sm:$0xff]
          %v810 = vld [vmem:[#allocation9 + $0x198] sm:$0xff]
          %v811 = vld [vmem:[#allocation9 + $0x1a0] sm:$0xff]
          %v812 = vld [vmem:[#allocation9 + $0x1a8] sm:$0xff]
          %v813 = vld [vmem:[#allocation9 + $0x1b0] sm:$0xff]
          %v814 = vld [vmem:[#allocation9 + $0x1b8] sm:$0xff]
          %v815 = vld [vmem:[#allocation9 + $0x1c0] sm:$0xff]
          %v816 = vld [vmem:[#allocation9 + $0x1c8] sm:$0xff]
          %v817 = vld [vmem:[#allocation9 + $0x1d0] sm:$0xff]
          %v818 = vld [vmem:[#allocation9 + $0x1d8] sm:$0xff]
          %v819 = vld [vmem:[#allocation9 + $0x1e0] sm:$0xff]
          %v820 = vld [vmem:[#allocation9 + $0x1e8] sm:$0xff]
          %v821 = vld [vmem:[#allocation9 + $0x1f0] sm:$0xff]
          %v822 = vld [vmem:[#allocation9 + $0x1f8] sm:$0xff]
          %v823 = vld [vmem:[%s3] sm:$0xf]
          %v825 = vlaneseq
          %v826 = vshrl.u32 %v825, 7
          %v827 = vsub.s32 0, %v826
          %v828 = vrot.slane %v823, %v827
          %v829 = vlaneseq
          %v830 = vshrl.u32 %v829, 7
          %v831 = vsub.s32 1, %v830
          %v832 = vrot.slane %v823, %v831
          %v833 = vlaneseq
          %v834 = vshrl.u32 %v833, 7
          %v835 = vsub.s32 2, %v834
          %v836 = vrot.slane %v823, %v835
          %v837 = vlaneseq
          %v838 = vshrl.u32 %v837, 7
          %v839 = vsub.s32 3, %v838
          %v840 = vrot.slane %v823, %v839
          %845 = vmatprep.subr.mxu0 %v760
          %846 = vmatpush1.msra.mxu0 %v759
          %847 = vmatprep.subr.mxu0 %v764
          %848 = vmatpush1.msra.mxu0 %v763
          %849 = vmatprep.subr.mxu0 %v768
          %850 = vmatpush1.msra.mxu0 %v767
          %851 = vmatprep.subr.mxu0 %v772
          %852 = vmatpush1.msra.mxu0 %v771
          %853 = vmatprep.subr.mxu0 %v776
          %854 = vmatpush1.msra.mxu0 %v775
          %855 = vmatprep.subr.mxu0 %v780
          %856 = vmatpush1.msra.mxu0 %v779
          %857 = vmatprep.subr.mxu0 %v784
          %858 = vmatpush1.msra.mxu0 %v783
          %859 = vmatprep.subr.mxu0 %v788
          %860 = vmatpush1.msra.mxu0 %v787
          %861 = vmatprep.subr.mxu0 %v792
          %862 = vmatpush1.msra.mxu0 %v791
          %863 = vmatprep.subr.mxu0 %v796
          %864 = vmatpush1.msra.mxu0 %v795
          %865 = vmatprep.subr.mxu0 %v800
          %866 = vmatpush1.msra.mxu0 %v799
          %867 = vmatprep.subr.mxu0 %v804
          %868 = vmatpush1.msra.mxu0 %v803
          %869 = vmatprep.subr.mxu0 %v808
          %870 = vmatpush1.msra.mxu0 %v807
          %871 = vmatprep.subr.mxu0 %v812
          %872 = vmatpush1.msra.mxu0 %v811
          %873 = vmatprep.subr.mxu0 %v816
          %874 = vmatpush1.msra.mxu0 %v815
          %875 = vmatprep.subr.mxu0 %v820
          %876 = vmatpush1.msra.mxu0 %v819
          %877 = vmatprep.subr.mxu0 0.0
          %878 = vmatpush1.msra.mxu0 0.0
          %879 = vmatprep.subr.mxu0 0.0
          %880 = vmatpush1.msra.mxu0 0.0
          %881 = vmatprep.subr.mxu0 0.0
          %882 = vmatpush1.msra.mxu0 0.0
          %883 = vmatprep.subr.mxu0 0.0
          %884 = vmatpush1.msra.mxu0 0.0
          %885 = vmatprep.subr.mxu0 0.0
          %886 = vmatpush1.msra.mxu0 0.0
          %887 = vmatprep.subr.mxu0 0.0
          %888 = vmatpush1.msra.mxu0 0.0
          %889 = vmatprep.subr.mxu0 0.0
          %890 = vmatpush1.msra.mxu0 0.0
          %891 = vmatprep.subr.mxu0 0.0
          %892 = vmatpush1.msra.mxu0 0.0
          %893 = vmatprep.subr.mxu0 0.0
          %894 = vmatpush1.msra.mxu0 0.0
          %895 = vmatprep.subr.mxu0 0.0
          %896 = vmatpush1.msra.mxu0 0.0
          %897 = vmatprep.subr.mxu0 0.0
          %898 = vmatpush1.msra.mxu0 0.0
          %899 = vmatprep.subr.mxu0 0.0
          %900 = vmatpush1.msra.mxu0 0.0
          %901 = vmatprep.subr.mxu0 0.0
          %902 = vmatpush1.msra.mxu0 0.0
          %903 = vmatprep.subr.mxu0 0.0
          %904 = vmatpush1.msra.mxu0 0.0
          %905 = vmatprep.subr.mxu0 0.0
          %906 = vmatpush1.msra.mxu0 0.0
          %907 = vmatprep.subr.mxu0 0.0
          %908 = vmatpush1.msra.mxu0 0.0
          %909 = vmatprep.mubr.f32.mxu0 0.0
          %910 = vmatmul.mubr.f32.gmra.mrb[0].mxu0 %v758
          %v911 = vpop.f32.mrb[0].mxu0
          %v912 = vadd.f32 %v828, %v911
          %v913 = vpop.f32.mrb[0].mxu0
          %v914 = vadd.f32 %v832, %v913
          %915 = vdwg.mxu0
          %916 = vmatprep.subr.mxu0 %v762
          %917 = vmatpush1.msra.mxu0 %v761
          %918 = vmatprep.subr.mxu0 %v766
          %919 = vmatpush1.msra.mxu0 %v765
          %920 = vmatprep.subr.mxu0 %v770
          %921 = vmatpush1.msra.mxu0 %v769
          %922 = vmatprep.subr.mxu0 %v774
          %923 = vmatpush1.msra.mxu0 %v773
          %924 = vmatprep.subr.mxu0 %v778
          %925 = vmatpush1.msra.mxu0 %v777
          %926 = vmatprep.subr.mxu0 %v782
          %927 = vmatpush1.msra.mxu0 %v781
          %928 = vmatprep.subr.mxu0 %v786
          %929 = vmatpush1.msra.mxu0 %v785
          %930 = vmatprep.subr.mxu0 %v790
          %931 = vmatpush1.msra.mxu0 %v789
          %932 = vmatprep.subr.mxu0 %v794
          %933 = vmatpush1.msra.mxu0 %v793
          %934 = vmatprep.subr.mxu0 %v798
          %935 = vmatpush1.msra.mxu0 %v797
          %936 = vmatprep.subr.mxu0 %v802
          %937 = vmatpush1.msra.mxu0 %v801
          %938 = vmatprep.subr.mxu0 %v806
          %939 = vmatpush1.msra.mxu0 %v805
          %940 = vmatprep.subr.mxu0 %v810
          %941 = vmatpush1.msra.mxu0 %v809
          %942 = vmatprep.subr.mxu0 %v814
          %943 = vmatpush1.msra.mxu0 %v813
          %944 = vmatprep.subr.mxu0 %v818
          %945 = vmatpush1.msra.mxu0 %v817
          %946 = vmatprep.subr.mxu0 %v822
          %947 = vmatpush1.msra.mxu0 %v821
          %948 = vmatprep.subr.mxu0 0.0
          %949 = vmatpush1.msra.mxu0 0.0
          %950 = vmatprep.subr.mxu0 0.0
          %951 = vmatpush1.msra.mxu0 0.0
          %952 = vmatprep.subr.mxu0 0.0
          %953 = vmatpush1.msra.mxu0 0.0
          %954 = vmatprep.subr.mxu0 0.0
          %955 = vmatpush1.msra.mxu0 0.0
          %956 = vmatprep.subr.mxu0 0.0
          %957 = vmatpush1.msra.mxu0 0.0
          %958 = vmatprep.subr.mxu0 0.0
          %959 = vmatpush1.msra.mxu0 0.0
          %960 = vmatprep.subr.mxu0 0.0
          %961 = vmatpush1.msra.mxu0 0.0
          %962 = vmatprep.subr.mxu0 0.0
          %963 = vmatpush1.msra.mxu0 0.0
          %964 = vmatprep.subr.mxu0 0.0
          %965 = vmatpush1.msra.mxu0 0.0
          %966 = vmatprep.subr.mxu0 0.0
          %967 = vmatpush1.msra.mxu0 0.0
          %968 = vmatprep.subr.mxu0 0.0
          %969 = vmatpush1.msra.mxu0 0.0
          %970 = vmatprep.subr.mxu0 0.0
          %971 = vmatpush1.msra.mxu0 0.0
          %972 = vmatprep.subr.mxu0 0.0
          %973 = vmatpush1.msra.mxu0 0.0
          %974 = vmatprep.subr.mxu0 0.0
          %975 = vmatpush1.msra.mxu0 0.0
          %976 = vmatprep.subr.mxu0 0.0
          %977 = vmatpush1.msra.mxu0 0.0
          %978 = vmatprep.subr.mxu0 0.0
          %979 = vmatpush1.msra.mxu0 0.0
          %980 = vmatprep.mubr.f32.mxu0 0.0
          %981 = vmatmul.mubr.f32.gmra.mrb[0].mxu0 %v758
          %v982 = vpop.f32.mrb[0].mxu0
          %v983 = vadd.f32 %v836, %v982
          %v984 = vpop.f32.mrb[0].mxu0
          %v985 = vadd.f32 %v840, %v984
          %986 = vdwg.mxu0
          %v987 = vld [vmem:[#allocation10] sm:$0xff]
          %v988 = vld [vmem:[#allocation10 + $0x8] sm:$0xff]
          %v989 = vld [vmem:[#allocation10 + $0x10] sm:$0xff]
          %v990 = vld [vmem:[#allocation10 + $0x18] sm:$0xff]
          %v991 = vld [vmem:[#allocation10 + $0x20] sm:$0xff]
          %v992 = vld [vmem:[#allocation10 + $0x28] sm:$0xff]
          %v993 = vld [vmem:[#allocation10 + $0x30] sm:$0xff]
          %v994 = vld [vmem:[#allocation10 + $0x38] sm:$0xff]
          %v995 = vld [vmem:[#allocation10 + $0x40] sm:$0xff]
          %v996 = vld [vmem:[#allocation10 + $0x48] sm:$0xff]
          %v997 = vld [vmem:[#allocation10 + $0x50] sm:$0xff]
          %v998 = vld [vmem:[#allocation10 + $0x58] sm:$0xff]
          %v999 = vld [vmem:[#allocation10 + $0x60] sm:$0xff]
          %v1000 = vld [vmem:[#allocation10 + $0x68] sm:$0xff]
          %v1001 = vld [vmem:[#allocation10 + $0x70] sm:$0xff]
          %v1002 = vld [vmem:[#allocation10 + $0x78] sm:$0xff]
          %v1003 = vld [vmem:[#allocation10 + $0x80] sm:$0xff]
          %v1004 = vld [vmem:[#allocation10 + $0x88] sm:$0xff]
          %v1005 = vld [vmem:[#allocation10 + $0x90] sm:$0xff]
          %v1006 = vld [vmem:[#allocation10 + $0x98] sm:$0xff]
          %v1007 = vld [vmem:[#allocation10 + $0xa0] sm:$0xff]
          %v1008 = vld [vmem:[#allocation10 + $0xa8] sm:$0xff]
          %v1009 = vld [vmem:[#allocation10 + $0xb0] sm:$0xff]
          %v1010 = vld [vmem:[#allocation10 + $0xb8] sm:$0xff]
          %v1011 = vld [vmem:[#allocation10 + $0xc0] sm:$0xff]
          %v1012 = vld [vmem:[#allocation10 + $0xc8] sm:$0xff]
          %v1013 = vld [vmem:[#allocation10 + $0xd0] sm:$0xff]
          %v1014 = vld [vmem:[#allocation10 + $0xd8] sm:$0xff]
          %v1015 = vld [vmem:[#allocation10 + $0xe0] sm:$0xff]
          %v1016 = vld [vmem:[#allocation10 + $0xe8] sm:$0xff]
          %v1017 = vld [vmem:[#allocation10 + $0xf0] sm:$0xff]
          %v1018 = vld [vmem:[#allocation10 + $0xf8] sm:$0xff]
          %v1019 = vld [vmem:[#allocation10 + $0x100] sm:$0xff]
          %v1020 = vld [vmem:[#allocation10 + $0x108] sm:$0xff]
          %v1021 = vld [vmem:[#allocation10 + $0x110] sm:$0xff]
          %v1022 = vld [vmem:[#allocation10 + $0x118] sm:$0xff]
          %v1023 = vld [vmem:[#allocation10 + $0x120] sm:$0xff]
          %v1024 = vld [vmem:[#allocation10 + $0x128] sm:$0xff]
          %v1025 = vld [vmem:[#allocation10 + $0x130] sm:$0xff]
          %v1026 = vld [vmem:[#allocation10 + $0x138] sm:$0xff]
          %v1027 = vld [vmem:[#allocation10 + $0x140] sm:$0xff]
          %v1028 = vld [vmem:[#allocation10 + $0x148] sm:$0xff]
          %v1029 = vld [vmem:[#allocation10 + $0x150] sm:$0xff]
          %v1030 = vld [vmem:[#allocation10 + $0x158] sm:$0xff]
          %v1031 = vld [vmem:[#allocation10 + $0x160] sm:$0xff]
          %v1032 = vld [vmem:[#allocation10 + $0x168] sm:$0xff]
          %v1033 = vld [vmem:[#allocation10 + $0x170] sm:$0xff]
          %v1034 = vld [vmem:[#allocation10 + $0x178] sm:$0xff]
          %v1035 = vld [vmem:[#allocation10 + $0x180] sm:$0xff]
          %v1036 = vld [vmem:[#allocation10 + $0x188] sm:$0xff]
          %v1037 = vld [vmem:[#allocation10 + $0x190] sm:$0xff]
          %v1038 = vld [vmem:[#allocation10 + $0x198] sm:$0xff]
          %v1039 = vld [vmem:[#allocation10 + $0x1a0] sm:$0xff]
          %v1040 = vld [vmem:[#allocation10 + $0x1a8] sm:$0xff]
          %v1041 = vld [vmem:[#allocation10 + $0x1b0] sm:$0xff]
          %v1042 = vld [vmem:[#allocation10 + $0x1b8] sm:$0xff]
          %v1043 = vld [vmem:[#allocation10 + $0x1c0] sm:$0xff]
          %v1044 = vld [vmem:[#allocation10 + $0x1c8] sm:$0xff]
          %v1045 = vld [vmem:[#allocation10 + $0x1d0] sm:$0xff]
          %v1046 = vld [vmem:[#allocation10 + $0x1d8] sm:$0xff]
          %v1047 = vld [vmem:[#allocation10 + $0x1e0] sm:$0xff]
          %v1048 = vld [vmem:[#allocation10 + $0x1e8] sm:$0xff]
          %v1049 = vld [vmem:[#allocation10 + $0x1f0] sm:$0xff]
          %v1050 = vld [vmem:[#allocation10 + $0x1f8] sm:$0xff]
          %v1051 = vld [vmem:[%s5] sm:$0x1]
          %v1053 = vlaneseq
          %v1054 = vshrl.u32 %v1053, 7
          %v1055 = vsub.s32 0, %v1054
          %v1056 = vrot.slane %v1051, %v1055
          %1058 = vmatprep.subr.mxu0 0.0
          %1059 = vmatpush1.msra.mxu0 %v987
          %1060 = vmatprep.subr.mxu0 0.0
          %1061 = vmatpush1.msra.mxu0 %v988
          %1062 = vmatprep.subr.mxu0 0.0
          %1063 = vmatpush1.msra.mxu0 %v989
          %1064 = vmatprep.subr.mxu0 0.0
          %1065 = vmatpush1.msra.mxu0 %v990
          %1066 = vmatprep.subr.mxu0 0.0
          %1067 = vmatpush1.msra.mxu0 %v991
          %1068 = vmatprep.subr.mxu0 0.0
          %1069 = vmatpush1.msra.mxu0 %v992
          %1070 = vmatprep.subr.mxu0 0.0
          %1071 = vmatpush1.msra.mxu0 %v993
          %1072 = vmatprep.subr.mxu0 0.0
          %1073 = vmatpush1.msra.mxu0 %v994
          %1074 = vmatprep.subr.mxu0 0.0
          %1075 = vmatpush1.msra.mxu0 %v995
          %1076 = vmatprep.subr.mxu0 0.0
          %1077 = vmatpush1.msra.mxu0 %v996
          %1078 = vmatprep.subr.mxu0 0.0
          %1079 = vmatpush1.msra.mxu0 %v997
          %1080 = vmatprep.subr.mxu0 0.0
          %1081 = vmatpush1.msra.mxu0 %v998
          %1082 = vmatprep.subr.mxu0 0.0
          %1083 = vmatpush1.msra.mxu0 %v999
          %1084 = vmatprep.subr.mxu0 0.0
          %1085 = vmatpush1.msra.mxu0 %v1000
          %1086 = vmatprep.subr.mxu0 0.0
          %1087 = vmatpush1.msra.mxu0 %v1001
          %1088 = vmatprep.subr.mxu0 0.0
          %1089 = vmatpush1.msra.mxu0 %v1002
          %1090 = vmatprep.subr.mxu0 0.0
          %1091 = vmatpush1.msra.mxu0 %v1003
          %1092 = vmatprep.subr.mxu0 0.0
          %1093 = vmatpush1.msra.mxu0 %v1004
          %1094 = vmatprep.subr.mxu0 0.0
          %1095 = vmatpush1.msra.mxu0 %v1005
          %1096 = vmatprep.subr.mxu0 0.0
          %1097 = vmatpush1.msra.mxu0 %v1006
          %1098 = vmatprep.subr.mxu0 0.0
          %1099 = vmatpush1.msra.mxu0 %v1007
          %1100 = vmatprep.subr.mxu0 0.0
          %1101 = vmatpush1.msra.mxu0 %v1008
          %1102 = vmatprep.subr.mxu0 0.0
          %1103 = vmatpush1.msra.mxu0 %v1009
          %1104 = vmatprep.subr.mxu0 0.0
          %1105 = vmatpush1.msra.mxu0 %v1010
          %1106 = vmatprep.subr.mxu0 0.0
          %1107 = vmatpush1.msra.mxu0 %v1011
          %1108 = vmatprep.subr.mxu0 0.0
          %1109 = vmatpush1.msra.mxu0 %v1012
          %1110 = vmatprep.subr.mxu0 0.0
          %1111 = vmatpush1.msra.mxu0 %v1013
          %1112 = vmatprep.subr.mxu0 0.0
          %1113 = vmatpush1.msra.mxu0 %v1014
          %1114 = vmatprep.subr.mxu0 0.0
          %1115 = vmatpush1.msra.mxu0 %v1015
          %1116 = vmatprep.subr.mxu0 0.0
          %1117 = vmatpush1.msra.mxu0 %v1016
          %1118 = vmatprep.subr.mxu0 0.0
          %1119 = vmatpush1.msra.mxu0 %v1017
          %1120 = vmatprep.subr.mxu0 0.0
          %1121 = vmatpush1.msra.mxu0 %v1018
          %1122 = vmatprep.mubr.f32.mxu0 %v914
          %1123 = vmatmul.mubr.f32.gmra.mrb[0].mxu0 %v912
          %v1124 = vpop.f32.mrb[0].mxu0
          %v1125 = vadd.f32 %v1056, %v1124
          %v1126 = vpop.f32.mrb[0].mxu0
          %1127 = vdwg.mxu0
          %1128 = vmatprep.subr.mxu0 0.0
          %1129 = vmatpush1.msra.mxu0 %v1019
          %1130 = vmatprep.subr.mxu0 0.0
          %1131 = vmatpush1.msra.mxu0 %v1020
          %1132 = vmatprep.subr.mxu0 0.0
          %1133 = vmatpush1.msra.mxu0 %v1021
          %1134 = vmatprep.subr.mxu0 0.0
          %1135 = vmatpush1.msra.mxu0 %v1022
          %1136 = vmatprep.subr.mxu0 0.0
          %1137 = vmatpush1.msra.mxu0 %v1023
          %1138 = vmatprep.subr.mxu0 0.0
          %1139 = vmatpush1.msra.mxu0 %v1024
          %1140 = vmatprep.subr.mxu0 0.0
          %1141 = vmatpush1.msra.mxu0 %v1025
          %1142 = vmatprep.subr.mxu0 0.0
          %1143 = vmatpush1.msra.mxu0 %v1026
          %1144 = vmatprep.subr.mxu0 0.0
          %1145 = vmatpush1.msra.mxu0 %v1027
          %1146 = vmatprep.subr.mxu0 0.0
          %1147 = vmatpush1.msra.mxu0 %v1028
          %1148 = vmatprep.subr.mxu0 0.0
          %1149 = vmatpush1.msra.mxu0 %v1029
          %1150 = vmatprep.subr.mxu0 0.0
          %1151 = vmatpush1.msra.mxu0 %v1030
          %1152 = vmatprep.subr.mxu0 0.0
          %1153 = vmatpush1.msra.mxu0 %v1031
          %1154 = vmatprep.subr.mxu0 0.0
          %1155 = vmatpush1.msra.mxu0 %v1032
          %1156 = vmatprep.subr.mxu0 0.0
          %1157 = vmatpush1.msra.mxu0 %v1033
          %1158 = vmatprep.subr.mxu0 0.0
          %1159 = vmatpush1.msra.mxu0 %v1034
          %1160 = vmatprep.subr.mxu0 0.0
          %1161 = vmatpush1.msra.mxu0 %v1035
          %1162 = vmatprep.subr.mxu0 0.0
          %1163 = vmatpush1.msra.mxu0 %v1036
          %1164 = vmatprep.subr.mxu0 0.0
          %1165 = vmatpush1.msra.mxu0 %v1037
          %1166 = vmatprep.subr.mxu0 0.0
          %1167 = vmatpush1.msra.mxu0 %v1038
          %1168 = vmatprep.subr.mxu0 0.0
          %1169 = vmatpush1.msra.mxu0 %v1039
          %1170 = vmatprep.subr.mxu0 0.0
          %1171 = vmatpush1.msra.mxu0 %v1040
          %1172 = vmatprep.subr.mxu0 0.0
          %1173 = vmatpush1.msra.mxu0 %v1041
          %1174 = vmatprep.subr.mxu0 0.0
          %1175 = vmatpush1.msra.mxu0 %v1042
          %1176 = vmatprep.subr.mxu0 0.0
          %1177 = vmatpush1.msra.mxu0 %v1043
          %1178 = vmatprep.subr.mxu0 0.0
          %1179 = vmatpush1.msra.mxu0 %v1044
          %1180 = vmatprep.subr.mxu0 0.0
          %1181 = vmatpush1.msra.mxu0 %v1045
          %1182 = vmatprep.subr.mxu0 0.0
          %1183 = vmatpush1.msra.mxu0 %v1046
          %1184 = vmatprep.subr.mxu0 0.0
          %1185 = vmatpush1.msra.mxu0 %v1047
          %1186 = vmatprep.subr.mxu0 0.0
          %1187 = vmatpush1.msra.mxu0 %v1048
          %1188 = vmatprep.subr.mxu0 0.0
          %1189 = vmatpush1.msra.mxu0 %v1049
          %1190 = vmatprep.subr.mxu0 0.0
          %1191 = vmatpush1.msra.mxu0 %v1050
          %1192 = vmatprep.mubr.f32.mxu0 %v985
          %1193 = vmatmul.mubr.f32.gmra.mrb[0].mxu0 %v983
          %v1194 = vpop.f32.mrb[0].mxu0
          %v1195 = vadd.f32 %v1125, %v1194
          %v1196 = vpop.f32.mrb[0].mxu0
          %1197 = vdwg.mxu0
          %v1198 = vmax.f32 %v1195, 0.0
          %v1199 = vld [vmem:[#allocation12] sm:$0xff]
          %v1200 = vld [vmem:[#allocation12 + $0x8] sm:$0xff]
          %v1201 = vld [vmem:[#allocation12 + $0x10] sm:$0xff]
          %v1202 = vld [vmem:[#allocation12 + $0x18] sm:$0xff]
          %v1203 = vld [vmem:[#allocation12 + $0x20] sm:$0xff]
          %v1204 = vld [vmem:[#allocation12 + $0x28] sm:$0xff]
          %v1205 = vld [vmem:[#allocation12 + $0x30] sm:$0xff]
          %v1206 = vld [vmem:[#allocation12 + $0x38] sm:$0xff]
          %v1207 = vld [vmem:[#allocation12 + $0x40] sm:$0xff]
          %v1208 = vld [vmem:[#allocation12 + $0x48] sm:$0xff]
          %v1209 = vld [vmem:[#allocation12 + $0x50] sm:$0xff]
          %v1210 = vld [vmem:[#allocation12 + $0x58] sm:$0xff]
          %v1211 = vld [vmem:[#allocation12 + $0x60] sm:$0xff]
          %v1212 = vld [vmem:[#allocation12 + $0x68] sm:$0xff]
          %v1213 = vld [vmem:[#allocation12 + $0x70] sm:$0xff]
          %v1214 = vld [vmem:[#allocation12 + $0x78] sm:$0xff]
          %v1215 = vld [vmem:[%s7] sm:$0x1]
          %v1217 = vlaneseq
          %v1218 = vshrl.u32 %v1217, 7
          %v1219 = vsub.s32 0, %v1218
          %v1220 = vrot.slane %v1215, %v1219
          %1222 = vmatprep.subr.mxu0 0.0
          %1223 = vmatpush1.msra.mxu0 %v1199
          %1224 = vmatprep.subr.mxu0 0.0
          %1225 = vmatpush1.msra.mxu0 %v1200
          %1226 = vmatprep.subr.mxu0 0.0
          %1227 = vmatpush1.msra.mxu0 %v1201
          %1228 = vmatprep.subr.mxu0 0.0
          %1229 = vmatpush1.msra.mxu0 %v1202
          %1230 = vmatprep.subr.mxu0 0.0
          %1231 = vmatpush1.msra.mxu0 %v1203
          %1232 = vmatprep.subr.mxu0 0.0
          %1233 = vmatpush1.msra.mxu0 %v1204
          %1234 = vmatprep.subr.mxu0 0.0
          %1235 = vmatpush1.msra.mxu0 %v1205
          %1236 = vmatprep.subr.mxu0 0.0
          %1237 = vmatpush1.msra.mxu0 %v1206
          %1238 = vmatprep.subr.mxu0 0.0
          %1239 = vmatpush1.msra.mxu0 %v1207
          %1240 = vmatprep.subr.mxu0 0.0
          %1241 = vmatpush1.msra.mxu0 %v1208
          %1242 = vmatprep.subr.mxu0 0.0
          %1243 = vmatpush1.msra.mxu0 %v1209
          %1244 = vmatprep.subr.mxu0 0.0
          %1245 = vmatpush1.msra.mxu0 %v1210
          %1246 = vmatprep.subr.mxu0 0.0
          %1247 = vmatpush1.msra.mxu0 %v1211
          %1248 = vmatprep.subr.mxu0 0.0
          %1249 = vmatpush1.msra.mxu0 %v1212
          %1250 = vmatprep.subr.mxu0 0.0
          %1251 = vmatpush1.msra.mxu0 %v1213
          %1252 = vmatprep.subr.mxu0 0.0
          %1253 = vmatpush1.msra.mxu0 %v1214
          %1254 = vmatprep.subr.mxu0 0.0
          %1255 = vmatpush1.msra.mxu0 0.0
          %1256 = vmatprep.subr.mxu0 0.0
          %1257 = vmatpush1.msra.mxu0 0.0
          %1258 = vmatprep.subr.mxu0 0.0
          %1259 = vmatpush1.msra.mxu0 0.0
          %1260 = vmatprep.subr.mxu0 0.0
          %1261 = vmatpush1.msra.mxu0 0.0
          %1262 = vmatprep.subr.mxu0 0.0
          %1263 = vmatpush1.msra.mxu0 0.0
          %1264 = vmatprep.subr.mxu0 0.0
          %1265 = vmatpush1.msra.mxu0 0.0
          %1266 = vmatprep.subr.mxu0 0.0
          %1267 = vmatpush1.msra.mxu0 0.0
          %1268 = vmatprep.subr.mxu0 0.0
          %1269 = vmatpush1.msra.mxu0 0.0
          %1270 = vmatprep.subr.mxu0 0.0
          %1271 = vmatpush1.msra.mxu0 0.0
          %1272 = vmatprep.subr.mxu0 0.0
          %1273 = vmatpush1.msra.mxu0 0.0
          %1274 = vmatprep.subr.mxu0 0.0
          %1275 = vmatpush1.msra.mxu0 0.0
          %1276 = vmatprep.subr.mxu0 0.0
          %1277 = vmatpush1.msra.mxu0 0.0
          %1278 = vmatprep.subr.mxu0 0.0
          %1279 = vmatpush1.msra.mxu0 0.0
          %1280 = vmatprep.subr.mxu0 0.0
          %1281 = vmatpush1.msra.mxu0 0.0
          %1282 = vmatprep.subr.mxu0 0.0
          %1283 = vmatpush1.msra.mxu0 0.0
          %1284 = vmatprep.subr.mxu0 0.0
          %1285 = vmatpush1.msra.mxu0 0.0
          %1286 = vmatprep.mubr.f32.mxu0 0.0
          %1287 = vmatmul.mubr.f32.gmra.mrb[0].mxu0 %v1198
          %v1288 = vpop.f32.mrb[0].mxu0
          %v1289 = vadd.f32 %v1220, %v1288
          %v1290 = vpop.f32.mrb[0].mxu0
          %1291 = vdwg.mxu0
          %v1292 = vxor.u32 %v1289, 2147483648
          %v1293 = vmul.f32 %v1292, 1.442695
          %v1294 = vpow.pop %v1293
          %v1295 = vadd.f32 %v1294, 1.0
          %v1296 = vrcp.pop %v1295
          %v1297 = vmul.f32 1.0, %v1296
          %vm1298 = vcmp.lt.s32.totalorder %v675, 10
          %v1299 = vsel %vm1298, %v1297, 0.0
          %v1300 = vld [vmem:[#allocation13] sm:$0xff]
          %v1301 = vld [vmem:[#allocation13 + $0x8] sm:$0xff]
          %v1302 = vld [vmem:[#allocation13 + $0x10] sm:$0xff]
          %v1303 = vld [vmem:[#allocation13 + $0x18] sm:$0xff]
          %v1304 = vld [vmem:[#allocation13 + $0x20] sm:$0xff]
          %v1305 = vld [vmem:[#allocation13 + $0x28] sm:$0xff]
          %v1306 = vld [vmem:[#allocation13 + $0x30] sm:$0xff]
          %v1307 = vld [vmem:[#allocation13 + $0x38] sm:$0xff]
          %v1308 = vld [vmem:[#allocation13 + $0x40] sm:$0xff]
          %v1309 = vld [vmem:[#allocation13 + $0x48] sm:$0xff]
          %v1310 = vld [vmem:[#allocation13 + $0x50] sm:$0xff]
          %v1311 = vld [vmem:[#allocation13 + $0x58] sm:$0xff]
          %v1312 = vld [vmem:[#allocation13 + $0x60] sm:$0xff]
          %v1313 = vld [vmem:[#allocation13 + $0x68] sm:$0xff]
          %v1314 = vld [vmem:[#allocation13 + $0x70] sm:$0xff]
          %v1315 = vld [vmem:[#allocation13 + $0x78] sm:$0xff]
          %v1316 = vld [vmem:[%s9] sm:$0x1]
          %v1318 = vlaneseq
          %v1319 = vshrl.u32 %v1318, 7
          %v1320 = vsub.s32 0, %v1319
          %v1321 = vrot.slane %v1316, %v1320
          %1323 = vmatprep.subr.mxu0 0.0
          %1324 = vmatpush1.msra.mxu0 %v1300
          %1325 = vmatprep.subr.mxu0 0.0
          %1326 = vmatpush1.msra.mxu0 %v1301
          %1327 = vmatprep.subr.mxu0 0.0
          %1328 = vmatpush1.msra.mxu0 %v1302
          %1329 = vmatprep.subr.mxu0 0.0
          %1330 = vmatpush1.msra.mxu0 %v1303
          %1331 = vmatprep.subr.mxu0 0.0
          %1332 = vmatpush1.msra.mxu0 %v1304
          %1333 = vmatprep.subr.mxu0 0.0
          %1334 = vmatpush1.msra.mxu0 %v1305
          %1335 = vmatprep.subr.mxu0 0.0
          %1336 = vmatpush1.msra.mxu0 %v1306
          %1337 = vmatprep.subr.mxu0 0.0
          %1338 = vmatpush1.msra.mxu0 %v1307
          %1339 = vmatprep.subr.mxu0 0.0
          %1340 = vmatpush1.msra.mxu0 %v1308
          %1341 = vmatprep.subr.mxu0 0.0
          %1342 = vmatpush1.msra.mxu0 %v1309
          %1343 = vmatprep.subr.mxu0 0.0
          %1344 = vmatpush1.msra.mxu0 %v1310
          %1345 = vmatprep.subr.mxu0 0.0
          %1346 = vmatpush1.msra.mxu0 %v1311
          %1347 = vmatprep.subr.mxu0 0.0
          %1348 = vmatpush1.msra.mxu0 %v1312
          %1349 = vmatprep.subr.mxu0 0.0
          %1350 = vmatpush1.msra.mxu0 %v1313
          %1351 = vmatprep.subr.mxu0 0.0
          %1352 = vmatpush1.msra.mxu0 %v1314
          %1353 = vmatprep.subr.mxu0 0.0
          %1354 = vmatpush1.msra.mxu0 %v1315
          %1355 = vmatprep.subr.mxu0 0.0
          %1356 = vmatpush1.msra.mxu0 0.0
          %1357 = vmatprep.subr.mxu0 0.0
          %1358 = vmatpush1.msra.mxu0 0.0
          %1359 = vmatprep.subr.mxu0 0.0
          %1360 = vmatpush1.msra.mxu0 0.0
          %1361 = vmatprep.subr.mxu0 0.0
          %1362 = vmatpush1.msra.mxu0 0.0
          %1363 = vmatprep.subr.mxu0 0.0
          %1364 = vmatpush1.msra.mxu0 0.0
          %1365 = vmatprep.subr.mxu0 0.0
          %1366 = vmatpush1.msra.mxu0 0.0
          %1367 = vmatprep.subr.mxu0 0.0
          %1368 = vmatpush1.msra.mxu0 0.0
          %1369 = vmatprep.subr.mxu0 0.0
          %1370 = vmatpush1.msra.mxu0 0.0
          %1371 = vmatprep.subr.mxu0 0.0
          %1372 = vmatpush1.msra.mxu0 0.0
          %1373 = vmatprep.subr.mxu0 0.0
          %1374 = vmatpush1.msra.mxu0 0.0
          %1375 = vmatprep.subr.mxu0 0.0
          %1376 = vmatpush1.msra.mxu0 0.0
          %1377 = vmatprep.subr.mxu0 0.0
          %1378 = vmatpush1.msra.mxu0 0.0
          %1379 = vmatprep.subr.mxu0 0.0
          %1380 = vmatpush1.msra.mxu0 0.0
          %1381 = vmatprep.subr.mxu0 0.0
          %1382 = vmatpush1.msra.mxu0 0.0
          %1383 = vmatprep.subr.mxu0 0.0
          %1384 = vmatpush1.msra.mxu0 0.0
          %1385 = vmatprep.subr.mxu0 0.0
          %1386 = vmatpush1.msra.mxu0 0.0
          %1387 = vmatprep.mubr.f32.mxu0 0.0
          %1388 = vmatmul.mubr.f32.gmra.mrb[0].mxu0 %v1299
          %v1389 = vpop.f32.mrb[0].mxu0
          %v1390 = vadd.f32 %v1321, %v1389
          %v1391 = vpop.f32.mrb[0].mxu0
          %1392 = vdwg.mxu0
          %v1393 = vmax.f32 %v1390, 0.0
          %v1394 = vld [vmem:[#allocation15] sm:$0xff]
          %v1395 = vld [vmem:[#allocation15 + $0x8] sm:$0xff]
          %v1396 = vld [vmem:[#allocation15 + $0x10] sm:$0xff]
          %v1397 = vld [vmem:[#allocation15 + $0x18] sm:$0xff]
          %v1398 = vld [vmem:[#allocation15 + $0x20] sm:$0xff]
          %v1399 = vld [vmem:[#allocation15 + $0x28] sm:$0xff]
          %v1400 = vld [vmem:[#allocation15 + $0x30] sm:$0xff]
          %v1401 = vld [vmem:[#allocation15 + $0x38] sm:$0xff]
          %v1402 = vld [vmem:[#allocation15 + $0x40] sm:$0xff]
          %v1403 = vld [vmem:[#allocation15 + $0x48] sm:$0xff]
          %v1404 = vld [vmem:[#allocation15 + $0x50] sm:$0xff]
          %v1405 = vld [vmem:[#allocation15 + $0x58] sm:$0xff]
          %v1406 = vld [vmem:[#allocation15 + $0x60] sm:$0xff]
          %v1407 = vld [vmem:[#allocation15 + $0x68] sm:$0xff]
          %v1408 = vld [vmem:[#allocation15 + $0x70] sm:$0xff]
          %v1409 = vld [vmem:[#allocation15 + $0x78] sm:$0xff]
          %v1410 = vld [vmem:[%s11] sm:$0x1]
          %v1412 = vlaneseq
          %v1413 = vshrl.u32 %v1412, 7
          %v1414 = vsub.s32 0, %v1413
          %v1415 = vrot.slane %v1410, %v1414
          %1417 = vmatprep.subr.mxu0 0.0
          %1418 = vmatpush1.msra.mxu0 %v1394
          %1419 = vmatprep.subr.mxu0 0.0
          %1420 = vmatpush1.msra.mxu0 %v1395
          %1421 = vmatprep.subr.mxu0 0.0
          %1422 = vmatpush1.msra.mxu0 %v1396
          %1423 = vmatprep.subr.mxu0 0.0
          %1424 = vmatpush1.msra.mxu0 %v1397
          %1425 = vmatprep.subr.mxu0 0.0
          %1426 = vmatpush1.msra.mxu0 %v1398
          %1427 = vmatprep.subr.mxu0 0.0
          %1428 = vmatpush1.msra.mxu0 %v1399
          %1429 = vmatprep.subr.mxu0 0.0
          %1430 = vmatpush1.msra.mxu0 %v1400
          %1431 = vmatprep.subr.mxu0 0.0
          %1432 = vmatpush1.msra.mxu0 %v1401
          %1433 = vmatprep.subr.mxu0 0.0
          %1434 = vmatpush1.msra.mxu0 %v1402
          %1435 = vmatprep.subr.mxu0 0.0
          %1436 = vmatpush1.msra.mxu0 %v1403
          %1437 = vmatprep.subr.mxu0 0.0
          %1438 = vmatpush1.msra.mxu0 %v1404
          %1439 = vmatprep.subr.mxu0 0.0
          %1440 = vmatpush1.msra.mxu0 %v1405
          %1441 = vmatprep.subr.mxu0 0.0
          %1442 = vmatpush1.msra.mxu0 %v1406
          %1443 = vmatprep.subr.mxu0 0.0
          %1444 = vmatpush1.msra.mxu0 %v1407
          %1445 = vmatprep.subr.mxu0 0.0
          %1446 = vmatpush1.msra.mxu0 %v1408
          %1447 = vmatprep.subr.mxu0 0.0
          %1448 = vmatpush1.msra.mxu0 %v1409
          %1449 = vmatprep.subr.mxu0 0.0
          %1450 = vmatpush1.msra.mxu0 0.0
          %1451 = vmatprep.subr.mxu0 0.0
          %1452 = vmatpush1.msra.mxu0 0.0
          %1453 = vmatprep.subr.mxu0 0.0
          %1454 = vmatpush1.msra.mxu0 0.0
          %1455 = vmatprep.subr.mxu0 0.0
          %1456 = vmatpush1.msra.mxu0 0.0
          %1457 = vmatprep.subr.mxu0 0.0
          %1458 = vmatpush1.msra.mxu0 0.0
          %1459 = vmatprep.subr.mxu0 0.0
          %1460 = vmatpush1.msra.mxu0 0.0
          %1461 = vmatprep.subr.mxu0 0.0
          %1462 = vmatpush1.msra.mxu0 0.0
          %1463 = vmatprep.subr.mxu0 0.0
          %1464 = vmatpush1.msra.mxu0 0.0
          %1465 = vmatprep.subr.mxu0 0.0
          %1466 = vmatpush1.msra.mxu0 0.0
          %1467 = vmatprep.subr.mxu0 0.0
          %1468 = vmatpush1.msra.mxu0 0.0
          %1469 = vmatprep.subr.mxu0 0.0
          %1470 = vmatpush1.msra.mxu0 0.0
          %1471 = vmatprep.subr.mxu0 0.0
          %1472 = vmatpush1.msra.mxu0 0.0
          %1473 = vmatprep.subr.mxu0 0.0
          %1474 = vmatpush1.msra.mxu0 0.0
          %1475 = vmatprep.subr.mxu0 0.0
          %1476 = vmatpush1.msra.mxu0 0.0
          %1477 = vmatprep.subr.mxu0 0.0
          %1478 = vmatpush1.msra.mxu0 0.0
          %1479 = vmatprep.subr.mxu0 0.0
          %1480 = vmatpush1.msra.mxu0 0.0
          %1481 = vmatprep.mubr.f32.mxu0 0.0
          %1482 = vmatmul.mubr.f32.gmra.mrb[0].mxu0 %v1393
          %v1483 = vpop.f32.mrb[0].mxu0
          %v1484 = vadd.f32 %v1415, %v1483
          %v1485 = vpop.f32.mrb[0].mxu0
          %1486 = vdwg.mxu0
          %1487 = vst [vmem:[#allocation17] sm:$0x3] %v1299
          %1488 = vst [vmem:[#allocation16] sm:$0x3] %v1484
        $region104: #{tpu_custom_call.1} parent=67 // pred_fallthru
          _
        // Predicated region
        $region105: #{tpu_custom_call.1} parent=67 // pred_check
          %p1489 = pneg %p322
        $region106: #{tpu_custom_call.1} parent=67 // pred_check_branch
          %1491 = sbr.rel (%p1489) target = $region108
        $region107: #{tpu_custom_call.1} parent=67 // pred_region
          %s1493 = ssub.s32 32, 32
          %1494 = vsyncadd [#allocation6], %s1493
          %s1495 = smul.addr %s37, 32
          %s1496 = scalar_lea.hbm %s12, %s1495
          %s1498 = sshll.u32 [#allocation16], 4
          %s1499 = int_to_ptr.vmem [resolvable:$true] %s1498
          %1501 = dma.vmem_to_hbm [thread:$0]  %s1499, 32, %s1496, [#allocation6]
        $region108: #{tpu_custom_call.1} parent=67 // pred_fallthru
          _
        // Predicated region
        $region109: #{tpu_custom_call.1} parent=67 // pred_check
          %p1502 = pneg %p348
        $region110: #{tpu_custom_call.1} parent=67 // pred_check_branch
          %1504 = sbr.rel (%p1502) target = $region112
        $region111: #{tpu_custom_call.1} parent=67 // pred_region
          %s1506 = ssub.s32 32, 32
          %1507 = vsyncadd [#allocation18], %s1506
          %s1508 = smul.addr %s37, 32
          %s1509 = scalar_lea.hbm %s13, %s1508
          %s1511 = sshll.u32 [#allocation17], 4
          %s1512 = int_to_ptr.vmem [resolvable:$true] %s1511
          %1514 = dma.vmem_to_hbm [thread:$0]  %s1512, 32, %s1509, [#allocation18]
        $region112: #{tpu_custom_call.1} parent=67 // pred_fallthru
          _
        // Predicated region
        $region113: #{tpu_custom_call.1} parent=67 // pred_check
          %p1515 = pneg %p322
        $region114: #{tpu_custom_call.1} parent=67 // pred_check_branch
          %1517 = sbr.rel (%p1515) target = $region116
        $region115: #{tpu_custom_call.1} parent=67 // pred_region
          %1518 = dma.done [#allocation6], 32
        $region116: #{tpu_custom_call.1} parent=67 // pred_fallthru
          _
        // Predicated region
        $region117: #{tpu_custom_call.1} parent=67 // pred_check
          %p1519 = pneg %p348
        $region118: #{tpu_custom_call.1} parent=67 // pred_check_branch
          %1521 = sbr.rel (%p1519) target = $region120
        $region119: #{tpu_custom_call.1} parent=67 // pred_region
          %1522 = dma.done [#allocation18], 32
        $region120: #{tpu_custom_call.1} parent=67 // pred_fallthru
          _
      $region68: #{tpu_custom_call.1} parent=5 // pred_fallthru
        _
      %p1523 = scmp.le.s32.totalorder 2, %s28
      // Predicated region
      $region121: #{tpu_custom_call.1} parent=5 // pred_check
        %p1524 = pneg %p1523
      $region122: #{tpu_custom_call.1} parent=5 // pred_check_branch
        %1526 = sbr.rel (%p1524) target = $region124
      $region123: #{tpu_custom_call.1} parent=5 // pred_region
        %s1527 = ssub.s32 %s28, 2
      $region124: #{tpu_custom_call.1} parent=5 // pred_fallthru
        _
    $region6: #{tpu_custom_call.1} parent=1 // loop_footer
      %s32 = sadd.s32 1, %s28
    $region7: #{tpu_custom_call.1} parent=1 // loop_footer_branch
      %27 = sbr.rel target = $region3
    $region8: #{tpu_custom_call.1} parent=1 // loop_exit
      _
    %1528 = vsyncpa [#allocation5], 1
    %s1529 = scalar_lea.sflag [#allocation5], 1
    %1530 = vsyncpa %s1529, 1
    %1531 = vsyncpa [#allocation8], 1
    %1532 = vsyncpa [#allocation11], 1
    %1533 = vsyncpa [#allocation14], 1
    %1534 = vsyncpa [#allocation6], 1
    %s1535 = scalar_lea.sflag [#allocation6], 1
    %1536 = vsyncpa %s1535, 1
    %1537 = vsyncpa [#allocation18], 1

</llo_original>
